<compile_context>
chip_gen: v7x
topology: tpu7x:2x2x1
jax: 0.10.0
libtpu: 0.0.40
codegen_flags: <defaults>
</compile_context>

<pallas_src>
import functools

import jax
import jax.numpy as jnp
from jax.experimental import pallas as pl
from jax.experimental.pallas import tpu as pltpu


def _round_up(n, m):
    return ((n + m - 1) // m) * m


def _mlp_kernel(xT_ref, w1_ref, b1_ref, w2_ref, b2_ref, w3_ref, b3_ref, o_ref,
                *, tanh_dtype):
    # Transposed layout: features on sublanes, batch on lanes (lane-dense).
    xT = xT_ref[...].astype(jnp.float32)                      # (in_dim, bb)
    w1 = w1_ref[...].astype(jnp.float32)                      # (h1, in_dim)
    in_dim = xT.shape[0]

    # ---- layer 1: K = in_dim (tiny) -> unrolled broadcast FMAs on the VPU ---
    acc = w1[:, 0:1] * xT[0:1, :]                             # (h1, bb)
    for k in range(1, in_dim):
        acc = acc + w1[:, k:k + 1] * xT[k:k + 1, :]
    acc = acc + b1_ref[...].astype(jnp.float32)
    h = jnp.tanh(acc.astype(tanh_dtype)).astype(jnp.float32)  # (h1, bb)

    # ---- layer 2: hidden2 x hidden1 matmul -> the only MXU-worthy matmul ----
    z = jnp.dot(w2_ref[...].astype(jnp.float32), h,
                preferred_element_type=jnp.float32,
                precision=jax.lax.Precision.HIGHEST)          # (h2, bb)
    z = z + b2_ref[...].astype(jnp.float32)
    h = jnp.tanh(z.astype(tanh_dtype)).astype(jnp.float32)    # (h2, bb)

    # ---- layer 3: N = out_dim ------------------------------------------------
    w3 = w3_ref[...].astype(jnp.float32)                      # (h2, out_dim)
    if w3.shape[1] == 1:
        # out_dim == 1: multiply + cross-sublane reduce; no MXU pass needed.
        out = jnp.sum(w3 * h, axis=0, keepdims=True)          # (1, bb)
    else:
        out = jax.lax.dot_general(
            w3, h, (((0,), (0,)), ((), ())),
            preferred_element_type=jnp.float32,
            precision=jax.lax.Precision.HIGHEST)              # (out_dim, bb)
    out = out + b3_ref[...].astype(jnp.float32)
    o_ref[...] = out.astype(o_ref.dtype)                      # lane-dense store


@functools.partial(jax.jit, static_argnames=("block_b", "bf16_tanh"))
def poisson_mle_forward_xt(xT, w1, b1, w2, b2, w3, b3, *,
                           block_b=16384, bf16_tanh=False):
    """log_intensity = MLP(x) with x given feature-major: xT (input_dim, B).

    Returns (B, out_dim).  Weights in the kernel layout documented above.
    """
    in_dim, B = xT.shape
    h1 = w1.shape[0]
    h2 = w2.shape[0]
    out_dim = w3.shape[1]

    # Batch lives on the lane axis -> tile must be a multiple of 128.
    # Clamp to the batch (no full-tile padding for small B) and aim for >= 2
    # grid steps when the batch allows it (keeps both v7x TensorCores busy).
    bb = max(128, (block_b // 128) * 128)
    bb = min(bb, max(128, _round_up((B + 1) // 2, 128)))
    grid = (pl.cdiv(B, bb),)

    def whole(a):
        # Resident weights / biases: full array, constant block index => the
        # DMA happens once and the buffer stays in VMEM across grid steps.
        nd = a.ndim
        return pl.BlockSpec(a.shape, lambda i, nd=nd: (0,) * nd)

    bytes_accessed = (
        xT.size * xT.dtype.itemsize
        + sum(a.size * a.dtype.itemsize for a in (w1, b1, w2, b2, w3, b3))
        + out_dim * B * xT.dtype.itemsize)
    cost = pl.CostEstimate(
        flops=2 * B * (in_dim * h1 + h1 * h2 + h2 * out_dim),
        transcendentals=B * (h1 + h2),
        bytes_accessed=bytes_accessed)

    kernel = functools.partial(
        _mlp_kernel,
        tanh_dtype=jnp.bfloat16 if bf16_tanh else jnp.float32)

    outT = pl.pallas_call(
        kernel,
        out_shape=jax.ShapeDtypeStruct((out_dim, B), xT.dtype),
        grid=grid,
        in_specs=[
            pl.BlockSpec((in_dim, bb), lambda i: (0, i)),
            whole(w1), whole(b1), whole(w2), whole(b2), whole(w3), whole(b3),
        ],
        out_specs=pl.BlockSpec((out_dim, bb), lambda i: (0, i)),
        compiler_params=pltpu.CompilerParams(
            dimension_semantics=("parallel",),
            vmem_limit_bytes=32 * 1024 * 1024),
        cost_estimate=cost,
    )(xT, w1, b1, w2, b2, w3, b3)

    # (out_dim, B) -> (B, out_dim); for out_dim == 1 this is a pure reshape
    # (no data movement), and there is no padded tail to slice off.
    return outT.T


@functools.partial(jax.jit, static_argnames=("block_b", "bf16_tanh"))
def poisson_mle_forward(x, w1, b1, w2, b2, w3, b3, *,
                        block_b=16384, bf16_tanh=False):
    """Module-layout entry: x (B, input_dim) -> (B, out_dim).

    The feature-major transpose here is the one remaining XLA-side copy; if
    the caller can keep x feature-major, use poisson_mle_forward_xt directly.
    """
    return poisson_mle_forward_xt(x.T, w1, b1, w2, b2, w3, b3,
                                  block_b=block_b, bf16_tanh=bf16_tanh)


def init_params(key, input_dim, hidden_dims, output_dim=1, dtype=jnp.float32):
    """Kaiming-uniform (tanh gain) weights + PyTorch-default bias init,
    produced directly in the kernel's compute layout:
      hidden layers: W (out, in),  b (out, 1)
      final layer:   W (in, out) (= PyTorch W.T),  b (out, 1)
    """
    gain = 5.0 / 3.0  # torch calculate_gain('tanh')
    params = []
    last_dim = input_dim
    dims = list(hidden_dims) + [output_dim]
    for li, h_dim in enumerate(dims):
        key, kw, kb = jax.random.split(key, 3)
        fan_in = last_dim
        w_bound = gain * (3.0 / fan_in) ** 0.5        # kaiming_uniform_ bound
        b_bound = 1.0 / (fan_in ** 0.5)               # nn.Linear default bias
        is_last = li == len(dims) - 1
        w_shape = (last_dim, h_dim) if is_last else (h_dim, last_dim)
        w = jax.random.uniform(kw, w_shape, dtype, -w_bound, w_bound)
        b = jax.random.uniform(kb, (h_dim, 1), dtype, -b_bound, b_bound)
        params.append((w, b))
        last_dim = h_dim
    return params


def reference_forward(x, params):
    """Pure-JAX reference for the 3-layer MLP (kernel-layout params)."""
    (w1, b1), (w2, b2), (w3, b3) = params
    hi = jax.lax.Precision.HIGHEST
    h = jnp.tanh(jnp.dot(x, w1.T, precision=hi) + b1.T)
    h = jnp.tanh(jnp.dot(h, w2.T, precision=hi) + b2.T)
    return jnp.dot(h, w3, precision=hi) + b3.T


if __name__ == "__main__":
    # Shapes implied by the module: input_dim=2 (2D point process),
    # hidden_dims=[32, 32], output_dim=1.  batch=1000 exercises the clamped
    # tile + ragged-tail path and gives a 2-step "parallel" grid.
    input_dim = 2
    hidden_dims = [32, 32]
    output_dim = 1
    batch = 1000

    key = jax.random.PRNGKey(0)
    key, kx = jax.random.split(key)
    x = jax.random.uniform(kx, (batch, input_dim), jnp.float32, 0.0, 1.0)

    params = init_params(jax.random.PRNGKey(0), input_dim, hidden_dims, output_dim)
    (w1, b1), (w2, b2), (w3, b3) = params

    log_intensity = poisson_mle_forward(x, w1, b1, w2, b2, w3, b3)
    log_intensity = jax.block_until_ready(log_intensity)

    # silent correctness check against a pure-JAX reference (f32 path)
    ref = reference_forward(x, params)
    assert log_intensity.shape == (batch, output_dim)
    assert jnp.allclose(log_intensity, ref, atol=1e-4, rtol=1e-4)

    print("KERNEL_OK")
</pallas_src>

<mosaic_0001>
module attributes {stable_mosaic.version = 11 : i64} {
  func.func @_mlp_kernel(%arg0: i32, %arg1: memref<2x512xf32, #tpu.memory_space<vmem>>, %arg2: memref<32x2xf32, #tpu.memory_space<vmem>>, %arg3: memref<32x1xf32, #tpu.memory_space<vmem>>, %arg4: memref<32x32xf32, #tpu.memory_space<vmem>>, %arg5: memref<32x1xf32, #tpu.memory_space<vmem>>, %arg6: memref<32x1xf32, #tpu.memory_space<vmem>>, %arg7: memref<1x1xf32, #tpu.memory_space<vmem>>, %arg8: memref<1x512xf32, #tpu.memory_space<vmem>>) attributes {dimension_semantics = [#tpu.dimension_semantics<parallel>], iteration_bounds = array<i64: 2>, scalar_prefetch = 0 : i64, scratch_operands = 0 : i64, tpu.core_type = #tpu.core_type<tc>, window_params = [{transform_indices = @transform_0, window_bounds = array<i64: 2, 512>}, {pipeline_mode = #tpu.pipeline_mode<synchronous>, transform_indices = @transform_1, window_bounds = array<i64: 32, 2>}, {pipeline_mode = #tpu.pipeline_mode<synchronous>, transform_indices = @transform_2, window_bounds = array<i64: 32, 1>}, {pipeline_mode = #tpu.pipeline_mode<synchronous>, transform_indices = @transform_3, window_bounds = array<i64: 32, 32>}, {pipeline_mode = #tpu.pipeline_mode<synchronous>, transform_indices = @transform_4, window_bounds = array<i64: 32, 1>}, {pipeline_mode = #tpu.pipeline_mode<synchronous>, transform_indices = @transform_5, window_bounds = array<i64: 32, 1>}, {pipeline_mode = #tpu.pipeline_mode<synchronous>, transform_indices = @transform_6, window_bounds = array<i64: 1, 1>}, {transform_indices = @transform_7, window_bounds = array<i64: 1, 512>}]} {
    %c0 = arith.constant 0 : index
    %c0_0 = arith.constant 0 : index
    %0 = vector.load %arg1[%c0, %c0_0] : memref<2x512xf32, #tpu.memory_space<vmem>>, vector<2x512xf32>
    %c0_1 = arith.constant 0 : index
    %c0_2 = arith.constant 0 : index
    %1 = vector.load %arg2[%c0_1, %c0_2] : memref<32x2xf32, #tpu.memory_space<vmem>>, vector<32x2xf32>
    %2 = vector.extract_strided_slice %1 {offsets = [0, 0], sizes = [32, 1], strides = [1, 1]} : vector<32x2xf32> to vector<32x1xf32>
    %3 = vector.extract_strided_slice %0 {offsets = [0, 0], sizes = [1, 512], strides = [1, 1]} : vector<2x512xf32> to vector<1x512xf32>
    %4 = vector.broadcast %2 : vector<32x1xf32> to vector<32x512xf32>
    %5 = vector.broadcast %3 : vector<1x512xf32> to vector<32x512xf32>
    %6 = arith.mulf %4, %5 : vector<32x512xf32>
    %7 = vector.extract_strided_slice %1 {offsets = [0, 1], sizes = [32, 1], strides = [1, 1]} : vector<32x2xf32> to vector<32x1xf32>
    %8 = vector.extract_strided_slice %0 {offsets = [1, 0], sizes = [1, 512], strides = [1, 1]} : vector<2x512xf32> to vector<1x512xf32>
    %9 = vector.broadcast %7 : vector<32x1xf32> to vector<32x512xf32>
    %10 = vector.broadcast %8 : vector<1x512xf32> to vector<32x512xf32>
    %11 = arith.mulf %9, %10 : vector<32x512xf32>
    %12 = arith.addf %6, %11 : vector<32x512xf32>
    %c0_3 = arith.constant 0 : index
    %c0_4 = arith.constant 0 : index
    %13 = vector.load %arg3[%c0_3, %c0_4] : memref<32x1xf32, #tpu.memory_space<vmem>>, vector<32x1xf32>
    %14 = vector.broadcast %13 : vector<32x1xf32> to vector<32x512xf32>
    %15 = arith.addf %12, %14 : vector<32x512xf32>
    %16 = math.tanh %15 : vector<32x512xf32>
    %c0_5 = arith.constant 0 : index
    %c0_6 = arith.constant 0 : index
    %17 = vector.load %arg4[%c0_5, %c0_6] : memref<32x32xf32, #tpu.memory_space<vmem>>, vector<32x32xf32>
    %cst = arith.constant dense<0.000000e+00> : vector<32x512xf32>
    %18 = tpu.matmul %17, %16, %cst {dimension_numbers = #tpu.dot_dimension_numbers<[1], [0], [0], [1], [0, 0, 1, 1], [], []>, precision = #tpu.contract_precision<fp32>} : vector<32x32xf32>, vector<32x512xf32>, vector<32x512xf32> -> vector<32x512xf32>
    %c0_7 = arith.constant 0 : index
    %c0_8 = arith.constant 0 : index
    %19 = vector.load %arg5[%c0_7, %c0_8] : memref<32x1xf32, #tpu.memory_space<vmem>>, vector<32x1xf32>
    %20 = vector.broadcast %19 : vector<32x1xf32> to vector<32x512xf32>
    %21 = arith.addf %18, %20 : vector<32x512xf32>
    %22 = math.tanh %21 : vector<32x512xf32>
    %c0_9 = arith.constant 0 : index
    %c0_10 = arith.constant 0 : index
    %23 = vector.load %arg6[%c0_9, %c0_10] : memref<32x1xf32, #tpu.memory_space<vmem>>, vector<32x1xf32>
    %24 = vector.broadcast %23 : vector<32x1xf32> to vector<32x512xf32>
    %25 = arith.mulf %24, %22 : vector<32x512xf32>
    %cst_11 = arith.constant dense<0.000000e+00> : vector<512xf32>
    %26 = vector.multi_reduction <add>, %25, %cst_11 [0] : vector<32x512xf32> to vector<512xf32>
    %27 = vector.shape_cast %26 : vector<512xf32> to vector<1x512xf32>
    %c0_12 = arith.constant 0 : index
    %c0_13 = arith.constant 0 : index
    %28 = vector.load %arg7[%c0_12, %c0_13] : memref<1x1xf32, #tpu.memory_space<vmem>>, vector<1x1xf32>
    %29 = vector.broadcast %28 : vector<1x1xf32> to vector<1x512xf32>
    %30 = arith.addf %27, %29 : vector<1x512xf32>
    %c0_14 = arith.constant 0 : index
    %c0_15 = arith.constant 0 : index
    %31 = vector.load %arg8[%c0_14, %c0_15] : memref<1x512xf32, #tpu.memory_space<vmem>>, vector<1x512xf32>
    tpu.vector_store %arg8[%c0_14, %c0_15], %30 {strides = array<i32>} : memref<1x512xf32, #tpu.memory_space<vmem>>, vector<1x512xf32>,
    return
  }
  func.func @transform_0(%arg0: i32) -> (i32, i32) {
    %c0_i32 = arith.constant 0 : i32
    %c0_i32_0 = arith.constant 0 : i32
    return %c0_i32, %arg0 : i32, i32
  }
  func.func @transform_1(%arg0: i32) -> (i32, i32) {
    %c0_i32 = arith.constant 0 : i32
    %c0_i32_0 = arith.constant 0 : i32
    %c0_i32_1 = arith.constant 0 : i32
    return %c0_i32, %c0_i32_0 : i32, i32
  }
  func.func @transform_2(%arg0: i32) -> (i32, i32) {
    %c0_i32 = arith.constant 0 : i32
    %c0_i32_0 = arith.constant 0 : i32
    %c0_i32_1 = arith.constant 0 : i32
    return %c0_i32, %c0_i32_0 : i32, i32
  }
  func.func @transform_3(%arg0: i32) -> (i32, i32) {
    %c0_i32 = arith.constant 0 : i32
    %c0_i32_0 = arith.constant 0 : i32
    %c0_i32_1 = arith.constant 0 : i32
    return %c0_i32, %c0_i32_0 : i32, i32
  }
  func.func @transform_4(%arg0: i32) -> (i32, i32) {
    %c0_i32 = arith.constant 0 : i32
    %c0_i32_0 = arith.constant 0 : i32
    %c0_i32_1 = arith.constant 0 : i32
    return %c0_i32, %c0_i32_0 : i32, i32
  }
  func.func @transform_5(%arg0: i32) -> (i32, i32) {
    %c0_i32 = arith.constant 0 : i32
    %c0_i32_0 = arith.constant 0 : i32
    %c0_i32_1 = arith.constant 0 : i32
    return %c0_i32, %c0_i32_0 : i32, i32
  }
  func.func @transform_6(%arg0: i32) -> (i32, i32) {
    %c0_i32 = arith.constant 0 : i32
    %c0_i32_0 = arith.constant 0 : i32
    %c0_i32_1 = arith.constant 0 : i32
    return %c0_i32, %c0_i32_0 : i32, i32
  }
  func.func @transform_7(%arg0: i32) -> (i32, i32) {
    %c0_i32 = arith.constant 0 : i32
    %c0_i32_0 = arith.constant 0 : i32
    return %c0_i32, %arg0 : i32, i32
  }
}

</mosaic_0001>

<llo_original>
// kernel: poisson_mle_forward_xt.1
$region0: #{poisson_mle_forward_xt.1}
  #allocation0 [shape = 'u32[]', space=smem, size = 0x4, offset = 0x4, fixed_abs, tag = 'smem constant byte address 0x4 - core index']
  #allocation1 [shape = 'u32[144,128]{1,0:T(1,128)}', space=vmem, size = 0x12000, scoped, tag = 'internal scratch']
  #allocation2 [shape = 'f32[1,1]{1,0:T(1,128)S(1)}', space=vmem, size = 0x200, scoped, tag = 'scoped memory for poisson_mle_forward_xt.1']
  %s0 = inlined_call_operand.vmem [shape: f32[2,1000], index: 0, kind: input, shape index: {}]
  %s1 = inlined_call_operand.vmem [shape: f32[32,2], index: 1, kind: input, shape index: {}]
  %s2 = inlined_call_operand.vmem [shape: f32[32,1], index: 2, kind: input, shape index: {}]
  %s3 = inlined_call_operand.vmem [shape: f32[32,32], index: 3, kind: input, shape index: {}]
  %s4 = inlined_call_operand.vmem [shape: f32[32,1], index: 4, kind: input, shape index: {}]
  %s5 = inlined_call_operand.vmem [shape: f32[32,1], index: 5, kind: input, shape index: {}]
  %s6 = inlined_call_operand.<no memory space> [shape: f32[1,1], index: 6, kind: input, shape index: {}]
  %s7 = inlined_call_operand.hbm [shape: f32[1,1000], index: 7, kind: output, shape index: {}]
  %s8 = sld [smem:[#allocation0]]
  $region61: #{poisson_mle_forward_xt.1} parent=0
    _
  %s10 = ssub.s32 1, %s8
  %s11 = scalar_select 0, %s10, %s8
  %v12 = vstv %s6
  %13 = vst [vmem:[#allocation2] sm:$0x1] %v12
  $region1: #{poisson_mle_forward_xt.1} parent=0
    #allocation3 [shape = 'u8[4096]{0}', space=vmem, size = 0x1000, scoped, tag = 'output window, operand 0']
    #allocation4 [shape = 's32[2]{0}', space=sflag, size = 0x8, scoped, tag = 'scoped memory for poisson_mle_forward_xt.1']
    %14 = vsyncpa [#allocation4], 0
    %s15 = scalar_lea.sflag [#allocation4], 1
    %16 = vsyncpa %s15, 0
    loop: start=0, step=1, limit=4
    $region2: #{poisson_mle_forward_xt.1} parent=1 // loop_pre_header
      _
    $region3: #{poisson_mle_forward_xt.1} parent=1 // loop_header
      %s18 = sphi 0, %s22
      %p19 = scmp.ge.s32.totalorder %s18, 4
      %s28 = sphi 0, %s30
      %s31 = sphi 0, %s28
      %s32 = sphi 0, %s31
      %s48 = sphi 0, %s32
      %s52 = sphi 0, %s52
      %s54 = sphi 0, %s52
      %s55 = sphi 0, %s54
      %s69 = sphi 0, %s55
      %s73 = sphi 0, %s73
      %s75 = sphi 0, %s73
      %s76 = sphi 0, %s75
      %s90 = sphi 0, %s76
      %s94 = sphi 0, %s94
      %s96 = sphi 0, %s94
      %s97 = sphi 0, %s96
      %s111 = sphi 0, %s97
      %s115 = sphi 0, %s115
      %s117 = sphi 0, %s115
      %s118 = sphi 0, %s117
      %s132 = sphi 0, %s118
      %s136 = sphi 0, %s136
      %s138 = sphi 0, %s136
      %s139 = sphi 0, %s138
      %s153 = sphi 0, %s139
      %s157 = sphi 0, %s157
      %s159 = sphi 0, %s157
      %s160 = sphi 0, %s159
      %s174 = sphi 0, %s160
      %s180 = sphi 0, %s182
      %s183 = sphi 0, %s180
      %s184 = sphi 0, %s183
      %s200 = sphi 0, %s184
    $region4: #{poisson_mle_forward_xt.1} parent=1 // loop_header_branch
      %21 = sbr.rel (%p19) target = $region8
    $region5: #{poisson_mle_forward_xt.1} parent=1 // loop_body
      %s23 = ssub.s32 %s18, 1
      %s24 = ssub.s32 %s18, 2
      %s25 = sadd.s32 %s18, 1
      %s26 = ssub.s32 %s18, %s25
      %p27 = scmp.eq.s32.totalorder %s26, 0
      %s29 = sadd.s32 %s28, 1
      %s30 = scalar_select %p27, %s28, %s29
      %p33 = pneg %p27
      %p34 = scmp.eq.s32.totalorder %s18, 1
      %p35 = por %p33, %p34
      %p36 = scmp.ne.s32.totalorder %s28, %s31
      %p37 = scmp.eq.s32.totalorder %s18, 0
      %p38 = por %p36, %p37
      %p39 = scmp.ne.s32.totalorder %s28, %s31
      %p40 = scmp.eq.s32.totalorder %s23, 1
      %p41 = por %p39, %p40
      %p42 = scmp.ne.s32.totalorder %s31, %s32
      %p43 = scmp.eq.s32.totalorder %s23, 0
      %p44 = por %p42, %p43
      %p45 = scmp.ne.s32.totalorder %s31, %s32
      %p46 = scmp.eq.s32.totalorder %s24, 1
      %p47 = por %p45, %p46
      %p49 = scmp.ne.s32.totalorder %s32, %s48
      %p50 = scmp.eq.s32.totalorder %s24, 0
      %p51 = por %p49, %p50
      %s53 = sadd.s32 %s52, 1
      %p56 = scmp.eq.s32.totalorder %s18, 1
      %p57 = scmp.ne.s32.totalorder %s52, %s54
      %p58 = scmp.eq.s32.totalorder %s18, 0
      %p59 = por %p57, %p58
      %p60 = scmp.ne.s32.totalorder %s52, %s54
      %p61 = scmp.eq.s32.totalorder %s23, 1
      %p62 = por %p60, %p61
      %p63 = scmp.ne.s32.totalorder %s54, %s55
      %p64 = scmp.eq.s32.totalorder %s23, 0
      %p65 = por %p63, %p64
      %p66 = scmp.ne.s32.totalorder %s54, %s55
      %p67 = scmp.eq.s32.totalorder %s24, 1
      %p68 = por %p66, %p67
      %p70 = scmp.ne.s32.totalorder %s55, %s69
      %p71 = scmp.eq.s32.totalorder %s24, 0
      %p72 = por %p70, %p71
      %s74 = sadd.s32 %s73, 1
      %p77 = scmp.eq.s32.totalorder %s18, 1
      %p78 = scmp.ne.s32.totalorder %s73, %s75
      %p79 = scmp.eq.s32.totalorder %s18, 0
      %p80 = por %p78, %p79
      %p81 = scmp.ne.s32.totalorder %s73, %s75
      %p82 = scmp.eq.s32.totalorder %s23, 1
      %p83 = por %p81, %p82
      %p84 = scmp.ne.s32.totalorder %s75, %s76
      %p85 = scmp.eq.s32.totalorder %s23, 0
      %p86 = por %p84, %p85
      %p87 = scmp.ne.s32.totalorder %s75, %s76
      %p88 = scmp.eq.s32.totalorder %s24, 1
      %p89 = por %p87, %p88
      %p91 = scmp.ne.s32.totalorder %s76, %s90
      %p92 = scmp.eq.s32.totalorder %s24, 0
      %p93 = por %p91, %p92
      %s95 = sadd.s32 %s94, 1
      %p98 = scmp.eq.s32.totalorder %s18, 1
      %p99 = scmp.ne.s32.totalorder %s94, %s96
      %p100 = scmp.eq.s32.totalorder %s18, 0
      %p101 = por %p99, %p100
      %p102 = scmp.ne.s32.totalorder %s94, %s96
      %p103 = scmp.eq.s32.totalorder %s23, 1
      %p104 = por %p102, %p103
      %p105 = scmp.ne.s32.totalorder %s96, %s97
      %p106 = scmp.eq.s32.totalorder %s23, 0
      %p107 = por %p105, %p106
      %p108 = scmp.ne.s32.totalorder %s96, %s97
      %p109 = scmp.eq.s32.totalorder %s24, 1
      %p110 = por %p108, %p109
      %p112 = scmp.ne.s32.totalorder %s97, %s111
      %p113 = scmp.eq.s32.totalorder %s24, 0
      %p114 = por %p112, %p113
      %s116 = sadd.s32 %s115, 1
      %p119 = scmp.eq.s32.totalorder %s18, 1
      %p120 = scmp.ne.s32.totalorder %s115, %s117
      %p121 = scmp.eq.s32.totalorder %s18, 0
      %p122 = por %p120, %p121
      %p123 = scmp.ne.s32.totalorder %s115, %s117
      %p124 = scmp.eq.s32.totalorder %s23, 1
      %p125 = por %p123, %p124
      %p126 = scmp.ne.s32.totalorder %s117, %s118
      %p127 = scmp.eq.s32.totalorder %s23, 0
      %p128 = por %p126, %p127
      %p129 = scmp.ne.s32.totalorder %s117, %s118
      %p130 = scmp.eq.s32.totalorder %s24, 1
      %p131 = por %p129, %p130
      %p133 = scmp.ne.s32.totalorder %s118, %s132
      %p134 = scmp.eq.s32.totalorder %s24, 0
      %p135 = por %p133, %p134
      %s137 = sadd.s32 %s136, 1
      %p140 = scmp.eq.s32.totalorder %s18, 1
      %p141 = scmp.ne.s32.totalorder %s136, %s138
      %p142 = scmp.eq.s32.totalorder %s18, 0
      %p143 = por %p141, %p142
      %p144 = scmp.ne.s32.totalorder %s136, %s138
      %p145 = scmp.eq.s32.totalorder %s23, 1
      %p146 = por %p144, %p145
      %p147 = scmp.ne.s32.totalorder %s138, %s139
      %p148 = scmp.eq.s32.totalorder %s23, 0
      %p149 = por %p147, %p148
      %p150 = scmp.ne.s32.totalorder %s138, %s139
      %p151 = scmp.eq.s32.totalorder %s24, 1
      %p152 = por %p150, %p151
      %p154 = scmp.ne.s32.totalorder %s139, %s153
      %p155 = scmp.eq.s32.totalorder %s24, 0
      %p156 = por %p154, %p155
      %s158 = sadd.s32 %s157, 1
      %p161 = scmp.eq.s32.totalorder %s18, 1
      %p162 = scmp.ne.s32.totalorder %s157, %s159
      %p163 = scmp.eq.s32.totalorder %s18, 0
      %p164 = por %p162, %p163
      %p165 = scmp.ne.s32.totalorder %s157, %s159
      %p166 = scmp.eq.s32.totalorder %s23, 1
      %p167 = por %p165, %p166
      %p168 = scmp.ne.s32.totalorder %s159, %s160
      %p169 = scmp.eq.s32.totalorder %s23, 0
      %p170 = por %p168, %p169
      %p171 = scmp.ne.s32.totalorder %s159, %s160
      %p172 = scmp.eq.s32.totalorder %s24, 1
      %p173 = por %p171, %p172
      %p175 = scmp.ne.s32.totalorder %s160, %s174
      %p176 = scmp.eq.s32.totalorder %s24, 0
      %p177 = por %p175, %p176
      %s178 = ssub.s32 %s18, %s25
      %p179 = scmp.eq.s32.totalorder %s178, 0
      %s181 = sadd.s32 %s180, 1
      %s182 = scalar_select %p179, %s180, %s181
      %p185 = pneg %p179
      %p186 = scmp.eq.s32.totalorder %s18, 1
      %p187 = por %p185, %p186
      %p188 = scmp.ne.s32.totalorder %s180, %s183
      %p189 = scmp.eq.s32.totalorder %s18, 0
      %p190 = por %p188, %p189
      %p191 = scmp.ne.s32.totalorder %s180, %s183
      %p192 = scmp.eq.s32.totalorder %s23, 1
      %p193 = por %p191, %p192
      %p194 = scmp.ne.s32.totalorder %s183, %s184
      %p195 = scmp.eq.s32.totalorder %s23, 0
      %p196 = por %p194, %p195
      %p197 = scmp.ne.s32.totalorder %s183, %s184
      %p198 = scmp.eq.s32.totalorder %s24, 1
      %p199 = por %p197, %p198
      %p201 = scmp.ne.s32.totalorder %s184, %s200
      %p202 = scmp.eq.s32.totalorder %s24, 0
      %p203 = por %p201, %p202
      %p204 = scmp.le.s32.totalorder 1, %s18
      %p205 = scmp.lt.s32.totalorder %s18, 3
      %p206 = pnand %p204, %p205
      %p207 = pneg %p206
      // Predicated region
      $region9: #{poisson_mle_forward_xt.1} parent=5 // pred_check
        _
      $region10: #{poisson_mle_forward_xt.1} parent=5 // pred_check_branch
        %209 = sbr.rel (%p206) target = $region12
      $region11: #{poisson_mle_forward_xt.1} parent=5 // pred_region
        %s210 = ssub.s32 %s18, 1
        // Predicated region
        $region13: #{poisson_mle_forward_xt.1} parent=11 // pred_check
          %p211 = pneg %p65
        $region14: #{poisson_mle_forward_xt.1} parent=11 // pred_check_branch
          %213 = sbr.rel (%p211) target = $region16
        $region15: #{poisson_mle_forward_xt.1} parent=11 // pred_region
          _
        $region16: #{poisson_mle_forward_xt.1} parent=11 // pred_fallthru
          _
        // Predicated region
        $region17: #{poisson_mle_forward_xt.1} parent=11 // pred_check
          %p214 = pneg %p86
        $region18: #{poisson_mle_forward_xt.1} parent=11 // pred_check_branch
          %216 = sbr.rel (%p214) target = $region20
        $region19: #{poisson_mle_forward_xt.1} parent=11 // pred_region
          _
        $region20: #{poisson_mle_forward_xt.1} parent=11 // pred_fallthru
          _
        // Predicated region
        $region21: #{poisson_mle_forward_xt.1} parent=11 // pred_check
          %p217 = pneg %p107
        $region22: #{poisson_mle_forward_xt.1} parent=11 // pred_check_branch
          %219 = sbr.rel (%p217) target = $region24
        $region23: #{poisson_mle_forward_xt.1} parent=11 // pred_region
          _
        $region24: #{poisson_mle_forward_xt.1} parent=11 // pred_fallthru
          _
        // Predicated region
        $region25: #{poisson_mle_forward_xt.1} parent=11 // pred_check
          %p220 = pneg %p128
        $region26: #{poisson_mle_forward_xt.1} parent=11 // pred_check_branch
          %222 = sbr.rel (%p220) target = $region28
        $region27: #{poisson_mle_forward_xt.1} parent=11 // pred_region
          _
        $region28: #{poisson_mle_forward_xt.1} parent=11 // pred_fallthru
          _
        // Predicated region
        $region29: #{poisson_mle_forward_xt.1} parent=11 // pred_check
          %p223 = pneg %p149
        $region30: #{poisson_mle_forward_xt.1} parent=11 // pred_check_branch
          %225 = sbr.rel (%p223) target = $region32
        $region31: #{poisson_mle_forward_xt.1} parent=11 // pred_region
          _
        $region32: #{poisson_mle_forward_xt.1} parent=11 // pred_fallthru
          _
        // Predicated region
        $region33: #{poisson_mle_forward_xt.1} parent=11 // pred_check
          %p226 = pneg %p170
        $region34: #{poisson_mle_forward_xt.1} parent=11 // pred_check_branch
          %228 = sbr.rel (%p226) target = $region36
        $region35: #{poisson_mle_forward_xt.1} parent=11 // pred_region
          _
        $region36: #{poisson_mle_forward_xt.1} parent=11 // pred_fallthru
          _
      $region12: #{poisson_mle_forward_xt.1} parent=5 // pred_fallthru
        _
      %p229 = scmp.lt.s32.totalorder %s18, 2
      // Predicated region
      $region37: #{poisson_mle_forward_xt.1} parent=5 // pred_check
        %p230 = pneg %p229
      $region38: #{poisson_mle_forward_xt.1} parent=5 // pred_check_branch
        %232 = sbr.rel (%p230) target = $region40
      $region39: #{poisson_mle_forward_xt.1} parent=5 // pred_region
        // Predicated region
        $region41: #{poisson_mle_forward_xt.1} parent=39 // pred_check
          %p233 = pneg %p38
        $region42: #{poisson_mle_forward_xt.1} parent=39 // pred_check_branch
          %235 = sbr.rel (%p233) target = $region44
        $region43: #{poisson_mle_forward_xt.1} parent=39 // pred_region
          %s236 = smul.u32 4, %s18
          %p237 = scmp.lt.s32.totalorder %s236, 7
          %s238 = scalar_select %p237, %s236, 7
          %s239 = smul.addr %s238, 2
          %s240 = scalar_lea.vmem %s0, %s239
          %s241 = smul.u32 4, %s18
        $region44: #{poisson_mle_forward_xt.1} parent=39 // pred_fallthru
          _
      $region40: #{poisson_mle_forward_xt.1} parent=5 // pred_fallthru
        _
      %p242 = scmp.le.s32.totalorder 1, %s18
      %p243 = scmp.lt.s32.totalorder %s18, 3
      %p244 = pnand %p242, %p243
      %p245 = pneg %p244
      // Predicated region
      $region45: #{poisson_mle_forward_xt.1} parent=5 // pred_check
        _
      $region46: #{poisson_mle_forward_xt.1} parent=5 // pred_check_branch
        %247 = sbr.rel (%p244) target = $region48
      $region47: #{poisson_mle_forward_xt.1} parent=5 // pred_region
        %s248 = ssub.s32 %s18, 1
        %s249 = smul.u32 4, %s23
        %p250 = scmp.lt.s32.totalorder %s249, 7
        %s251 = scalar_select %p250, %s249, 7
        %s252 = smul.addr %s251, 2
        %s253 = scalar_lea.vmem %s0, %s252
        %p254 = pneg %p44
        %p255 = pneg %p41
        %p256 = pneg %p65
        %p257 = pneg %p62
        %p258 = pneg %p86
        %p259 = pneg %p83
        %p260 = pneg %p107
        %p261 = pneg %p104
        %p262 = pneg %p128
        %p263 = pneg %p125
        %p264 = pneg %p149
        %p265 = pneg %p146
        %p266 = pneg %p170
        %p267 = pneg %p167
        %p268 = pneg %p196
        %p269 = pneg %p193
        %s270 = sand.u32 %s183, 1
        %s271 = scalar_lea.sflag [#allocation4], %s270
        %s272 = sand.u32 %s183, 1
        %s273 = smul.addr %s272, 4
        %s274 = scalar_lea.vmem [#allocation3], %s273
        %s275 = smul.u32 4, %s23
        %p276 = scmp.lt.s32.totalorder %s275, 7
        %s277 = scalar_select %p276, %s275, 7
        %s278 = smul.addr %s277, 2
        %s279 = scalar_lea.vmem %s0, %s278
        %s280 = smul.u32 4, %s23
        %s281 = smul.u32 4, %s23
        %v282 = vld [vmem:[%s279] sm:$0xff]
        %v283 = vld [vmem:[%s1] sm:$0xff]
        %v284 = vld [vmem:[%s1 + $0x8] sm:$0xff]
        %v285 = vld [vmem:[%s1 + $0x10] sm:$0xff]
        %v286 = vld [vmem:[%s1 + $0x18] sm:$0xff]
        %288 = vset.pattern.permute.xlu0 0
        %289 = vperm.xlu0 %288, %v283
        %v290 = vpop.permute.xlu0 %289
        %293 = vset.pattern.permute.xlu0 0
        %294 = vperm.xlu0 %293, %v284
        %v295 = vpop.permute.xlu0 %294
        %298 = vset.pattern.permute.xlu0 0
        %299 = vperm.xlu0 %298, %v285
        %v300 = vpop.permute.xlu0 %299
        %303 = vset.pattern.permute.xlu0 0
        %304 = vperm.xlu0 %303, %v286
        %v305 = vpop.permute.xlu0 %304
        %v308 = vlaneseq
        %v309 = vshrl.u32 %v308, 7
        %v310 = vsub.s32 0, %v309
        %v311 = vrot.slane %v282, %v310
        %v312 = vlaneseq
        %v313 = vshrl.u32 %v312, 7
        %v314 = vsub.s32 2, %v313
        %v315 = vrot.slane %v282, %v314
        %v316 = vlaneseq
        %v317 = vshrl.u32 %v316, 7
        %v318 = vsub.s32 4, %v317
        %v319 = vrot.slane %v282, %v318
        %v320 = vlaneseq
        %v321 = vshrl.u32 %v320, 7
        %v322 = vsub.s32 6, %v321
        %v323 = vrot.slane %v282, %v322
        %v328 = vlaneseq
        %v329 = vshrl.u32 %v328, 7
        %v330 = vsub.s32 0, %v329
        %v331 = vrot.slane %v311, %v330
        %v332 = vlaneseq
        %v333 = vshrl.u32 %v332, 7
        %v334 = vsub.s32 0, %v333
        %v335 = vrot.slane %v315, %v334
        %v336 = vlaneseq
        %v337 = vshrl.u32 %v336, 7
        %v338 = vsub.s32 0, %v337
        %v339 = vrot.slane %v319, %v338
        %v340 = vlaneseq
        %v341 = vshrl.u32 %v340, 7
        %v342 = vsub.s32 0, %v341
        %v343 = vrot.slane %v323, %v342
        %v344 = vmul.f32 %v290, %v331
        %v345 = vmul.f32 %v290, %v335
        %v346 = vmul.f32 %v290, %v339
        %v347 = vmul.f32 %v290, %v343
        %v348 = vmul.f32 %v295, %v331
        %v349 = vmul.f32 %v295, %v335
        %v350 = vmul.f32 %v295, %v339
        %v351 = vmul.f32 %v295, %v343
        %v352 = vmul.f32 %v300, %v331
        %v353 = vmul.f32 %v300, %v335
        %v354 = vmul.f32 %v300, %v339
        %v355 = vmul.f32 %v300, %v343
        %v356 = vmul.f32 %v305, %v331
        %v357 = vmul.f32 %v305, %v335
        %v358 = vmul.f32 %v305, %v339
        %v359 = vmul.f32 %v305, %v343
        %360 = vset.pattern.permute.xlu0 1
        %361 = vperm.xlu0 %360, %v283
        %v362 = vpop.permute.xlu0 %361
        %364 = vset.pattern.permute.xlu0 1
        %365 = vperm.xlu0 %364, %v284
        %v366 = vpop.permute.xlu0 %365
        %368 = vset.pattern.permute.xlu0 1
        %369 = vperm.xlu0 %368, %v285
        %v370 = vpop.permute.xlu0 %369
        %372 = vset.pattern.permute.xlu0 1
        %373 = vperm.xlu0 %372, %v286
        %v374 = vpop.permute.xlu0 %373
        %v376 = vlaneseq
        %v377 = vshrl.u32 %v376, 7
        %v378 = vsub.s32 1, %v377
        %v379 = vrot.slane %v282, %v378
        %v380 = vlaneseq
        %v381 = vshrl.u32 %v380, 7
        %v382 = vsub.s32 3, %v381
        %v383 = vrot.slane %v282, %v382
        %v384 = vlaneseq
        %v385 = vshrl.u32 %v384, 7
        %v386 = vsub.s32 5, %v385
        %v387 = vrot.slane %v282, %v386
        %v388 = vlaneseq
        %v389 = vshrl.u32 %v388, 7
        %v390 = vsub.s32 7, %v389
        %v391 = vrot.slane %v282, %v390
        %v396 = vlaneseq
        %v397 = vshrl.u32 %v396, 7
        %v398 = vsub.s32 1, %v397
        %v399 = vrot.slane %v379, %v398
        %v400 = vlaneseq
        %v401 = vshrl.u32 %v400, 7
        %v402 = vsub.s32 1, %v401
        %v403 = vrot.slane %v383, %v402
        %v404 = vlaneseq
        %v405 = vshrl.u32 %v404, 7
        %v406 = vsub.s32 1, %v405
        %v407 = vrot.slane %v387, %v406
        %v408 = vlaneseq
        %v409 = vshrl.u32 %v408, 7
        %v410 = vsub.s32 1, %v409
        %v411 = vrot.slane %v391, %v410
        %v412 = vmul.f32 %v362, %v399
        %v413 = vmul.f32 %v362, %v403
        %v414 = vmul.f32 %v362, %v407
        %v415 = vmul.f32 %v362, %v411
        %v416 = vmul.f32 %v366, %v399
        %v417 = vmul.f32 %v366, %v403
        %v418 = vmul.f32 %v366, %v407
        %v419 = vmul.f32 %v366, %v411
        %v420 = vmul.f32 %v370, %v399
        %v421 = vmul.f32 %v370, %v403
        %v422 = vmul.f32 %v370, %v407
        %v423 = vmul.f32 %v370, %v411
        %v424 = vmul.f32 %v374, %v399
        %v425 = vmul.f32 %v374, %v403
        %v426 = vmul.f32 %v374, %v407
        %v427 = vmul.f32 %v374, %v411
        %v428 = vadd.f32 %v344, %v412
        %v429 = vadd.f32 %v345, %v413
        %v430 = vadd.f32 %v346, %v414
        %v431 = vadd.f32 %v347, %v415
        %v432 = vadd.f32 %v348, %v416
        %v433 = vadd.f32 %v349, %v417
        %v434 = vadd.f32 %v350, %v418
        %v435 = vadd.f32 %v351, %v419
        %v436 = vadd.f32 %v352, %v420
        %v437 = vadd.f32 %v353, %v421
        %v438 = vadd.f32 %v354, %v422
        %v439 = vadd.f32 %v355, %v423
        %v440 = vadd.f32 %v356, %v424
        %v441 = vadd.f32 %v357, %v425
        %v442 = vadd.f32 %v358, %v426
        %v443 = vadd.f32 %v359, %v427
        %v444 = vld [vmem:[%s2] sm:$0xff]
        %v445 = vld [vmem:[%s2 + $0x8] sm:$0xff]
        %v446 = vld [vmem:[%s2 + $0x10] sm:$0xff]
        %v447 = vld [vmem:[%s2 + $0x18] sm:$0xff]
        %449 = vset.pattern.permute.xlu0 0
        %450 = vperm.xlu0 %449, %v444
        %v451 = vpop.permute.xlu0 %450
        %454 = vset.pattern.permute.xlu0 0
        %455 = vperm.xlu0 %454, %v445
        %v456 = vpop.permute.xlu0 %455
        %459 = vset.pattern.permute.xlu0 0
        %460 = vperm.xlu0 %459, %v446
        %v461 = vpop.permute.xlu0 %460
        %464 = vset.pattern.permute.xlu0 0
        %465 = vperm.xlu0 %464, %v447
        %v466 = vpop.permute.xlu0 %465
        %v468 = vadd.f32 %v428, %v451
        %v469 = vadd.f32 %v429, %v451
        %v470 = vadd.f32 %v430, %v451
        %v471 = vadd.f32 %v431, %v451
        %v472 = vadd.f32 %v432, %v456
        %v473 = vadd.f32 %v433, %v456
        %v474 = vadd.f32 %v434, %v456
        %v475 = vadd.f32 %v435, %v456
        %v476 = vadd.f32 %v436, %v461
        %v477 = vadd.f32 %v437, %v461
        %v478 = vadd.f32 %v438, %v461
        %v479 = vadd.f32 %v439, %v461
        %v480 = vadd.f32 %v440, %v466
        %v481 = vadd.f32 %v441, %v466
        %v482 = vadd.f32 %v442, %v466
        %v483 = vadd.f32 %v443, %v466
        %v484 = vtanh.pop %v468
        %v485 = vtanh.pop %v469
        %v486 = vtanh.pop %v470
        %v487 = vtanh.pop %v471
        %v488 = vtanh.pop %v472
        %v489 = vtanh.pop %v473
        %v490 = vtanh.pop %v474
        %v491 = vtanh.pop %v475
        %v492 = vtanh.pop %v476
        %v493 = vtanh.pop %v477
        %v494 = vtanh.pop %v478
        %v495 = vtanh.pop %v479
        %v496 = vtanh.pop %v480
        %v497 = vtanh.pop %v481
        %v498 = vtanh.pop %v482
        %v499 = vtanh.pop %v483
        %v500 = vld [vmem:[%s3] sm:$0xff]
        %v501 = vld [vmem:[%s3 + $0x8] sm:$0xff]
        %v502 = vld [vmem:[%s3 + $0x10] sm:$0xff]
        %v503 = vld [vmem:[%s3 + $0x18] sm:$0xff]
        %v504 = vld [vmem:[%s4] sm:$0xff]
        %v505 = vld [vmem:[%s4 + $0x8] sm:$0xff]
        %v506 = vld [vmem:[%s4 + $0x10] sm:$0xff]
        %v507 = vld [vmem:[%s4 + $0x18] sm:$0xff]
        %509 = vset.pattern.permute.xlu0 0
        %510 = vperm.xlu0 %509, %v504
        %v511 = vpop.permute.xlu0 %510
        %514 = vset.pattern.permute.xlu0 0
        %515 = vperm.xlu0 %514, %v505
        %v516 = vpop.permute.xlu0 %515
        %519 = vset.pattern.permute.xlu0 0
        %520 = vperm.xlu0 %519, %v506
        %v521 = vpop.permute.xlu0 %520
        %524 = vset.pattern.permute.xlu0 0
        %525 = vperm.xlu0 %524, %v507
        %v526 = vpop.permute.xlu0 %525
        %vm528 = vcmask 261120
        %v530 = vsel %vm528, %v500, 0
        %v533 = vsel %vm528, %v501, 0
        %v536 = vsel %vm528, %v502, 0
        %v539 = vsel %vm528, %v503, 0
        %v541 = vand.u32 %v485, 4294901760
        %542 = vmatprep.subr.mxu0 %v541
        %v543 = vand.u32 %v484, 4294901760
        %544 = vmatpush1.msra.mxu0 %v543
        %v545 = vand.u32 %v489, 4294901760
        %546 = vmatprep.subr.mxu0 %v545
        %v547 = vand.u32 %v488, 4294901760
        %548 = vmatpush1.msra.mxu0 %v547
        %v549 = vand.u32 %v493, 4294901760
        %550 = vmatprep.subr.mxu0 %v549
        %v551 = vand.u32 %v492, 4294901760
        %552 = vmatpush1.msra.mxu0 %v551
        %v553 = vand.u32 %v497, 4294901760
        %554 = vmatprep.subr.mxu0 %v553
        %v555 = vand.u32 %v496, 4294901760
        %556 = vmatpush1.msra.mxu0 %v555
        %557 = vmatprep.subr.mxu0 0.0
        %558 = vmatpush1.msra.mxu0 0.0
        %559 = vmatprep.subr.mxu0 0.0
        %560 = vmatpush1.msra.mxu0 0.0
        %561 = vmatprep.subr.mxu0 0.0
        %562 = vmatpush1.msra.mxu0 0.0
        %563 = vmatprep.subr.mxu0 0.0
        %564 = vmatpush1.msra.mxu0 0.0
        %565 = vmatprep.subr.mxu0 0.0
        %566 = vmatpush1.msra.mxu0 0.0
        %567 = vmatprep.subr.mxu0 0.0
        %568 = vmatpush1.msra.mxu0 0.0
        %569 = vmatprep.subr.mxu0 0.0
        %570 = vmatpush1.msra.mxu0 0.0
        %571 = vmatprep.subr.mxu0 0.0
        %572 = vmatpush1.msra.mxu0 0.0
        %573 = vmatprep.subr.mxu0 0.0
        %574 = vmatpush1.msra.mxu0 0.0
        %575 = vmatprep.subr.mxu0 0.0
        %576 = vmatpush1.msra.mxu0 0.0
        %577 = vmatprep.subr.mxu0 0.0
        %578 = vmatpush1.msra.mxu0 0.0
        %579 = vmatprep.subr.mxu0 0.0
        %580 = vmatpush1.msra.mxu0 0.0
        %581 = vmatprep.subr.mxu0 0.0
        %582 = vmatpush1.msra.mxu0 0.0
        %583 = vmatprep.subr.mxu0 0.0
        %584 = vmatpush1.msra.mxu0 0.0
        %585 = vmatprep.subr.mxu0 0.0
        %586 = vmatpush1.msra.mxu0 0.0
        %587 = vmatprep.subr.mxu0 0.0
        %588 = vmatpush1.msra.mxu0 0.0
        %589 = vmatprep.subr.mxu0 0.0
        %590 = vmatpush1.msra.mxu0 0.0
        %591 = vmatprep.subr.mxu0 0.0
        %592 = vmatpush1.msra.mxu0 0.0
        %593 = vmatprep.subr.mxu0 0.0
        %594 = vmatpush1.msra.mxu0 0.0
        %595 = vmatprep.subr.mxu0 0.0
        %596 = vmatpush1.msra.mxu0 0.0
        %597 = vmatprep.subr.mxu0 0.0
        %598 = vmatpush1.msra.mxu0 0.0
        %599 = vmatprep.subr.mxu0 0.0
        %600 = vmatpush1.msra.mxu0 0.0
        %601 = vmatprep.subr.mxu0 0.0
        %602 = vmatpush1.msra.mxu0 0.0
        %603 = vmatprep.subr.mxu0 0.0
        %604 = vmatpush1.msra.mxu0 0.0
        %605 = vmatprep.subr.mxu0 0.0
        %606 = vmatpush1.msra.mxu0 0.0
        %607 = vmatprep.subr.mxu0 0.0
        %608 = vmatpush1.msra.mxu0 0.0
        %609 = vmatprep.subr.mxu0 0.0
        %610 = vmatpush1.msra.mxu0 0.0
        %611 = vmatprep.subr.mxu0 0.0
        %612 = vmatpush1.msra.mxu0 0.0
        %613 = vmatprep.mubr.f32.mxu0 0.0
        %v614 = vand.u32 %v530, 4294901760
        %v615 = vsub.f32 %v530, %v614
        %v616 = vand.u32 %v615, 4294901760
        %v617 = vsub.f32 %v615, %v616
        %v618 = vand.u32 %v617, 4294901760
        %619 = vmatmul.mubr.f32.gmra.mrb[0].mxu0 %v618
        %v620 = vpop.f32.mrb[0].mxu0
        %v621 = vadd.f32 %v511, %v620
        %v622 = vpop.f32.mrb[0].mxu0
        %v623 = vadd.f32 %v511, %v622
        %624 = vmatprep.mubr.f32.mxu0 0.0
        %v625 = vand.u32 %v533, 4294901760
        %v626 = vsub.f32 %v533, %v625
        %v627 = vand.u32 %v626, 4294901760
        %v628 = vsub.f32 %v626, %v627
        %v629 = vand.u32 %v628, 4294901760
        %630 = vmatmul.mubr.f32.gmra.mrb[0].mxu0 %v629
        %v631 = vpop.f32.mrb[0].mxu0
        %v632 = vadd.f32 %v516, %v631
        %v633 = vpop.f32.mrb[0].mxu0
        %v634 = vadd.f32 %v516, %v633
        %635 = vmatprep.mubr.f32.mxu0 0.0
        %v636 = vand.u32 %v536, 4294901760
        %v637 = vsub.f32 %v536, %v636
        %v638 = vand.u32 %v637, 4294901760
        %v639 = vsub.f32 %v637, %v638
        %v640 = vand.u32 %v639, 4294901760
        %641 = vmatmul.mubr.f32.gmra.mrb[0].mxu0 %v640
        %v642 = vpop.f32.mrb[0].mxu0
        %v643 = vadd.f32 %v521, %v642
        %v644 = vpop.f32.mrb[0].mxu0
        %v645 = vadd.f32 %v521, %v644
        %646 = vmatprep.mubr.f32.mxu0 0.0
        %v647 = vand.u32 %v539, 4294901760
        %v648 = vsub.f32 %v539, %v647
        %v649 = vand.u32 %v648, 4294901760
        %v650 = vsub.f32 %v648, %v649
        %v651 = vand.u32 %v650, 4294901760
        %652 = vmatmul.mubr.f32.gmra.mrb[0].mxu0 %v651
        %v653 = vpop.f32.mrb[0].mxu0
        %v654 = vadd.f32 %v526, %v653
        %v655 = vpop.f32.mrb[0].mxu0
        %v656 = vadd.f32 %v526, %v655
        %657 = vdwg.mxu0
        %v658 = vand.u32 %v485, 4294901760
        %v659 = vsub.f32 %v485, %v658
        %v660 = vand.u32 %v659, 4294901760
        %v661 = vsub.f32 %v659, %v660
        %v662 = vand.u32 %v661, 4294901760
        %663 = vmatprep.subr.mxu0 %v662
        %v664 = vand.u32 %v484, 4294901760
        %v665 = vsub.f32 %v484, %v664
        %v666 = vand.u32 %v665, 4294901760
        %v667 = vsub.f32 %v665, %v666
        %v668 = vand.u32 %v667, 4294901760
        %669 = vmatpush1.msra.mxu0 %v668
        %v670 = vand.u32 %v489, 4294901760
        %v671 = vsub.f32 %v489, %v670
        %v672 = vand.u32 %v671, 4294901760
        %v673 = vsub.f32 %v671, %v672
        %v674 = vand.u32 %v673, 4294901760
        %675 = vmatprep.subr.mxu0 %v674
        %v676 = vand.u32 %v488, 4294901760
        %v677 = vsub.f32 %v488, %v676
        %v678 = vand.u32 %v677, 4294901760
        %v679 = vsub.f32 %v677, %v678
        %v680 = vand.u32 %v679, 4294901760
        %681 = vmatpush1.msra.mxu0 %v680
        %v682 = vand.u32 %v493, 4294901760
        %v683 = vsub.f32 %v493, %v682
        %v684 = vand.u32 %v683, 4294901760
        %v685 = vsub.f32 %v683, %v684
        %v686 = vand.u32 %v685, 4294901760
        %687 = vmatprep.subr.mxu0 %v686
        %v688 = vand.u32 %v492, 4294901760
        %v689 = vsub.f32 %v492, %v688
        %v690 = vand.u32 %v689, 4294901760
        %v691 = vsub.f32 %v689, %v690
        %v692 = vand.u32 %v691, 4294901760
        %693 = vmatpush1.msra.mxu0 %v692
        %v694 = vand.u32 %v497, 4294901760
        %v695 = vsub.f32 %v497, %v694
        %v696 = vand.u32 %v695, 4294901760
        %v697 = vsub.f32 %v695, %v696
        %v698 = vand.u32 %v697, 4294901760
        %699 = vmatprep.subr.mxu0 %v698
        %v700 = vand.u32 %v496, 4294901760
        %v701 = vsub.f32 %v496, %v700
        %v702 = vand.u32 %v701, 4294901760
        %v703 = vsub.f32 %v701, %v702
        %v704 = vand.u32 %v703, 4294901760
        %705 = vmatpush1.msra.mxu0 %v704
        %706 = vmatprep.subr.mxu0 0.0
        %707 = vmatpush1.msra.mxu0 0.0
        %708 = vmatprep.subr.mxu0 0.0
        %709 = vmatpush1.msra.mxu0 0.0
        %710 = vmatprep.subr.mxu0 0.0
        %711 = vmatpush1.msra.mxu0 0.0
        %712 = vmatprep.subr.mxu0 0.0
        %713 = vmatpush1.msra.mxu0 0.0
        %714 = vmatprep.subr.mxu0 0.0
        %715 = vmatpush1.msra.mxu0 0.0
        %716 = vmatprep.subr.mxu0 0.0
        %717 = vmatpush1.msra.mxu0 0.0
        %718 = vmatprep.subr.mxu0 0.0
        %719 = vmatpush1.msra.mxu0 0.0
        %720 = vmatprep.subr.mxu0 0.0
        %721 = vmatpush1.msra.mxu0 0.0
        %722 = vmatprep.subr.mxu0 0.0
        %723 = vmatpush1.msra.mxu0 0.0
        %724 = vmatprep.subr.mxu0 0.0
        %725 = vmatpush1.msra.mxu0 0.0
        %726 = vmatprep.subr.mxu0 0.0
        %727 = vmatpush1.msra.mxu0 0.0
        %728 = vmatprep.subr.mxu0 0.0
        %729 = vmatpush1.msra.mxu0 0.0
        %730 = vmatprep.subr.mxu0 0.0
        %731 = vmatpush1.msra.mxu0 0.0
        %732 = vmatprep.subr.mxu0 0.0
        %733 = vmatpush1.msra.mxu0 0.0
        %734 = vmatprep.subr.mxu0 0.0
        %735 = vmatpush1.msra.mxu0 0.0
        %736 = vmatprep.subr.mxu0 0.0
        %737 = vmatpush1.msra.mxu0 0.0
        %738 = vmatprep.subr.mxu0 0.0
        %739 = vmatpush1.msra.mxu0 0.0
        %740 = vmatprep.subr.mxu0 0.0
        %741 = vmatpush1.msra.mxu0 0.0
        %742 = vmatprep.subr.mxu0 0.0
        %743 = vmatpush1.msra.mxu0 0.0
        %744 = vmatprep.subr.mxu0 0.0
        %745 = vmatpush1.msra.mxu0 0.0
        %746 = vmatprep.subr.mxu0 0.0
        %747 = vmatpush1.msra.mxu0 0.0
        %748 = vmatprep.subr.mxu0 0.0
        %749 = vmatpush1.msra.mxu0 0.0
        %750 = vmatprep.subr.mxu0 0.0
        %751 = vmatpush1.msra.mxu0 0.0
        %752 = vmatprep.subr.mxu0 0.0
        %753 = vmatpush1.msra.mxu0 0.0
        %754 = vmatprep.subr.mxu0 0.0
        %755 = vmatpush1.msra.mxu0 0.0
        %756 = vmatprep.subr.mxu0 0.0
        %757 = vmatpush1.msra.mxu0 0.0
        %758 = vmatprep.subr.mxu0 0.0
        %759 = vmatpush1.msra.mxu0 0.0
        %760 = vmatprep.subr.mxu0 0.0
        %761 = vmatpush1.msra.mxu0 0.0
        %762 = vmatprep.mubr.f32.mxu0 0.0
        %v763 = vand.u32 %v530, 4294901760
        %764 = vmatmul.mubr.f32.gmra.mrb[0].mxu0 %v763
        %v765 = vpop.f32.mrb[0].mxu0
        %v766 = vadd.f32 %v621, %v765
        %v767 = vpop.f32.mrb[0].mxu0
        %v768 = vadd.f32 %v623, %v767
        %769 = vmatprep.mubr.f32.mxu0 0.0
        %v770 = vand.u32 %v533, 4294901760
        %771 = vmatmul.mubr.f32.gmra.mrb[0].mxu0 %v770
        %v772 = vpop.f32.mrb[0].mxu0
        %v773 = vadd.f32 %v632, %v772
        %v774 = vpop.f32.mrb[0].mxu0
        %v775 = vadd.f32 %v634, %v774
        %776 = vmatprep.mubr.f32.mxu0 0.0
        %v777 = vand.u32 %v536, 4294901760
        %778 = vmatmul.mubr.f32.gmra.mrb[0].mxu0 %v777
        %v779 = vpop.f32.mrb[0].mxu0
        %v780 = vadd.f32 %v643, %v779
        %v781 = vpop.f32.mrb[0].mxu0
        %v782 = vadd.f32 %v645, %v781
        %783 = vmatprep.mubr.f32.mxu0 0.0
        %v784 = vand.u32 %v539, 4294901760
        %785 = vmatmul.mubr.f32.gmra.mrb[0].mxu0 %v784
        %v786 = vpop.f32.mrb[0].mxu0
        %v787 = vadd.f32 %v654, %v786
        %v788 = vpop.f32.mrb[0].mxu0
        %v789 = vadd.f32 %v656, %v788
        %790 = vdwg.mxu0
        %v791 = vand.u32 %v485, 4294901760
        %v792 = vsub.f32 %v485, %v791
        %793 = vmatprep.subr.mxu0 %v792
        %v794 = vand.u32 %v484, 4294901760
        %v795 = vsub.f32 %v484, %v794
        %796 = vmatpush1.msra.mxu0 %v795
        %v797 = vand.u32 %v489, 4294901760
        %v798 = vsub.f32 %v489, %v797
        %799 = vmatprep.subr.mxu0 %v798
        %v800 = vand.u32 %v488, 4294901760
        %v801 = vsub.f32 %v488, %v800
        %802 = vmatpush1.msra.mxu0 %v801
        %v803 = vand.u32 %v493, 4294901760
        %v804 = vsub.f32 %v493, %v803
        %805 = vmatprep.subr.mxu0 %v804
        %v806 = vand.u32 %v492, 4294901760
        %v807 = vsub.f32 %v492, %v806
        %808 = vmatpush1.msra.mxu0 %v807
        %v809 = vand.u32 %v497, 4294901760
        %v810 = vsub.f32 %v497, %v809
        %811 = vmatprep.subr.mxu0 %v810
        %v812 = vand.u32 %v496, 4294901760
        %v813 = vsub.f32 %v496, %v812
        %814 = vmatpush1.msra.mxu0 %v813
        %815 = vmatprep.subr.mxu0 0.0
        %816 = vmatpush1.msra.mxu0 0.0
        %817 = vmatprep.subr.mxu0 0.0
        %818 = vmatpush1.msra.mxu0 0.0
        %819 = vmatprep.subr.mxu0 0.0
        %820 = vmatpush1.msra.mxu0 0.0
        %821 = vmatprep.subr.mxu0 0.0
        %822 = vmatpush1.msra.mxu0 0.0
        %823 = vmatprep.subr.mxu0 0.0
        %824 = vmatpush1.msra.mxu0 0.0
        %825 = vmatprep.subr.mxu0 0.0
        %826 = vmatpush1.msra.mxu0 0.0
        %827 = vmatprep.subr.mxu0 0.0
        %828 = vmatpush1.msra.mxu0 0.0
        %829 = vmatprep.subr.mxu0 0.0
        %830 = vmatpush1.msra.mxu0 0.0
        %831 = vmatprep.subr.mxu0 0.0
        %832 = vmatpush1.msra.mxu0 0.0
        %833 = vmatprep.subr.mxu0 0.0
        %834 = vmatpush1.msra.mxu0 0.0
        %835 = vmatprep.subr.mxu0 0.0
        %836 = vmatpush1.msra.mxu0 0.0
        %837 = vmatprep.subr.mxu0 0.0
        %838 = vmatpush1.msra.mxu0 0.0
        %839 = vmatprep.subr.mxu0 0.0
        %840 = vmatpush1.msra.mxu0 0.0
        %841 = vmatprep.subr.mxu0 0.0
        %842 = vmatpush1.msra.mxu0 0.0
        %843 = vmatprep.subr.mxu0 0.0
        %844 = vmatpush1.msra.mxu0 0.0
        %845 = vmatprep.subr.mxu0 0.0
        %846 = vmatpush1.msra.mxu0 0.0
        %847 = vmatprep.subr.mxu0 0.0
        %848 = vmatpush1.msra.mxu0 0.0
        %849 = vmatprep.subr.mxu0 0.0
        %850 = vmatpush1.msra.mxu0 0.0
        %851 = vmatprep.subr.mxu0 0.0
        %852 = vmatpush1.msra.mxu0 0.0
        %853 = vmatprep.subr.mxu0 0.0
        %854 = vmatpush1.msra.mxu0 0.0
        %855 = vmatprep.subr.mxu0 0.0
        %856 = vmatpush1.msra.mxu0 0.0
        %857 = vmatprep.subr.mxu0 0.0
        %858 = vmatpush1.msra.mxu0 0.0
        %859 = vmatprep.subr.mxu0 0.0
        %860 = vmatpush1.msra.mxu0 0.0
        %861 = vmatprep.subr.mxu0 0.0
        %862 = vmatpush1.msra.mxu0 0.0
        %863 = vmatprep.subr.mxu0 0.0
        %864 = vmatpush1.msra.mxu0 0.0
        %865 = vmatprep.subr.mxu0 0.0
        %866 = vmatpush1.msra.mxu0 0.0
        %867 = vmatprep.subr.mxu0 0.0
        %868 = vmatpush1.msra.mxu0 0.0
        %869 = vmatprep.subr.mxu0 0.0
        %870 = vmatpush1.msra.mxu0 0.0
        %871 = vmatprep.mubr.f32.mxu0 0.0
        %v872 = vand.u32 %v530, 4294901760
        %v873 = vsub.f32 %v530, %v872
        %874 = vmatmul.mubr.f32.gmra.mrb[0].mxu0 %v873
        %v875 = vpop.f32.mrb[0].mxu0
        %v876 = vadd.f32 %v766, %v875
        %v877 = vpop.f32.mrb[0].mxu0
        %v878 = vadd.f32 %v768, %v877
        %879 = vmatprep.mubr.f32.mxu0 0.0
        %v880 = vand.u32 %v533, 4294901760
        %v881 = vsub.f32 %v533, %v880
        %882 = vmatmul.mubr.f32.gmra.mrb[0].mxu0 %v881
        %v883 = vpop.f32.mrb[0].mxu0
        %v884 = vadd.f32 %v773, %v883
        %v885 = vpop.f32.mrb[0].mxu0
        %v886 = vadd.f32 %v775, %v885
        %887 = vmatprep.mubr.f32.mxu0 0.0
        %v888 = vand.u32 %v536, 4294901760
        %v889 = vsub.f32 %v536, %v888
        %890 = vmatmul.mubr.f32.gmra.mrb[0].mxu0 %v889
        %v891 = vpop.f32.mrb[0].mxu0
        %v892 = vadd.f32 %v780, %v891
        %v893 = vpop.f32.mrb[0].mxu0
        %v894 = vadd.f32 %v782, %v893
        %895 = vmatprep.mubr.f32.mxu0 0.0
        %v896 = vand.u32 %v539, 4294901760
        %v897 = vsub.f32 %v539, %v896
        %898 = vmatmul.mubr.f32.gmra.mrb[0].mxu0 %v897
        %v899 = vpop.f32.mrb[0].mxu0
        %v900 = vadd.f32 %v787, %v899
        %v901 = vpop.f32.mrb[0].mxu0
        %v902 = vadd.f32 %v789, %v901
        %903 = vdwg.mxu0
        %v904 = vand.u32 %v485, 4294901760
        %905 = vmatprep.subr.mxu0 %v904
        %v906 = vand.u32 %v484, 4294901760
        %907 = vmatpush1.msra.mxu0 %v906
        %v908 = vand.u32 %v489, 4294901760
        %909 = vmatprep.subr.mxu0 %v908
        %v910 = vand.u32 %v488, 4294901760
        %911 = vmatpush1.msra.mxu0 %v910
        %v912 = vand.u32 %v493, 4294901760
        %913 = vmatprep.subr.mxu0 %v912
        %v914 = vand.u32 %v492, 4294901760
        %915 = vmatpush1.msra.mxu0 %v914
        %v916 = vand.u32 %v497, 4294901760
        %917 = vmatprep.subr.mxu0 %v916
        %v918 = vand.u32 %v496, 4294901760
        %919 = vmatpush1.msra.mxu0 %v918
        %920 = vmatprep.subr.mxu0 0.0
        %921 = vmatpush1.msra.mxu0 0.0
        %922 = vmatprep.subr.mxu0 0.0
        %923 = vmatpush1.msra.mxu0 0.0
        %924 = vmatprep.subr.mxu0 0.0
        %925 = vmatpush1.msra.mxu0 0.0
        %926 = vmatprep.subr.mxu0 0.0
        %927 = vmatpush1.msra.mxu0 0.0
        %928 = vmatprep.subr.mxu0 0.0
        %929 = vmatpush1.msra.mxu0 0.0
        %930 = vmatprep.subr.mxu0 0.0
        %931 = vmatpush1.msra.mxu0 0.0
        %932 = vmatprep.subr.mxu0 0.0
        %933 = vmatpush1.msra.mxu0 0.0
        %934 = vmatprep.subr.mxu0 0.0
        %935 = vmatpush1.msra.mxu0 0.0
        %936 = vmatprep.subr.mxu0 0.0
        %937 = vmatpush1.msra.mxu0 0.0
        %938 = vmatprep.subr.mxu0 0.0
        %939 = vmatpush1.msra.mxu0 0.0
        %940 = vmatprep.subr.mxu0 0.0
        %941 = vmatpush1.msra.mxu0 0.0
        %942 = vmatprep.subr.mxu0 0.0
        %943 = vmatpush1.msra.mxu0 0.0
        %944 = vmatprep.subr.mxu0 0.0
        %945 = vmatpush1.msra.mxu0 0.0
        %946 = vmatprep.subr.mxu0 0.0
        %947 = vmatpush1.msra.mxu0 0.0
        %948 = vmatprep.subr.mxu0 0.0
        %949 = vmatpush1.msra.mxu0 0.0
        %950 = vmatprep.subr.mxu0 0.0
        %951 = vmatpush1.msra.mxu0 0.0
        %952 = vmatprep.subr.mxu0 0.0
        %953 = vmatpush1.msra.mxu0 0.0
        %954 = vmatprep.subr.mxu0 0.0
        %955 = vmatpush1.msra.mxu0 0.0
        %956 = vmatprep.subr.mxu0 0.0
        %957 = vmatpush1.msra.mxu0 0.0
        %958 = vmatprep.subr.mxu0 0.0
        %959 = vmatpush1.msra.mxu0 0.0
        %960 = vmatprep.subr.mxu0 0.0
        %961 = vmatpush1.msra.mxu0 0.0
        %962 = vmatprep.subr.mxu0 0.0
        %963 = vmatpush1.msra.mxu0 0.0
        %964 = vmatprep.subr.mxu0 0.0
        %965 = vmatpush1.msra.mxu0 0.0
        %966 = vmatprep.subr.mxu0 0.0
        %967 = vmatpush1.msra.mxu0 0.0
        %968 = vmatprep.subr.mxu0 0.0
        %969 = vmatpush1.msra.mxu0 0.0
        %970 = vmatprep.subr.mxu0 0.0
        %971 = vmatpush1.msra.mxu0 0.0
        %972 = vmatprep.subr.mxu0 0.0
        %973 = vmatpush1.msra.mxu0 0.0
        %974 = vmatprep.subr.mxu0 0.0
        %975 = vmatpush1.msra.mxu0 0.0
        %976 = vmatprep.mubr.f32.mxu0 0.0
        %v977 = vand.u32 %v530, 4294901760
        %v978 = vsub.f32 %v530, %v977
        %v979 = vand.u32 %v978, 4294901760
        %980 = vmatmul.mubr.f32.gmra.mrb[0].mxu0 %v979
        %v981 = vpop.f32.mrb[0].mxu0
        %v982 = vadd.f32 %v876, %v981
        %v983 = vpop.f32.mrb[0].mxu0
        %v984 = vadd.f32 %v878, %v983
        %985 = vmatprep.mubr.f32.mxu0 0.0
        %v986 = vand.u32 %v533, 4294901760
        %v987 = vsub.f32 %v533, %v986
        %v988 = vand.u32 %v987, 4294901760
        %989 = vmatmul.mubr.f32.gmra.mrb[0].mxu0 %v988
        %v990 = vpop.f32.mrb[0].mxu0
        %v991 = vadd.f32 %v884, %v990
        %v992 = vpop.f32.mrb[0].mxu0
        %v993 = vadd.f32 %v886, %v992
        %994 = vmatprep.mubr.f32.mxu0 0.0
        %v995 = vand.u32 %v536, 4294901760
        %v996 = vsub.f32 %v536, %v995
        %v997 = vand.u32 %v996, 4294901760
        %998 = vmatmul.mubr.f32.gmra.mrb[0].mxu0 %v997
        %v999 = vpop.f32.mrb[0].mxu0
        %v1000 = vadd.f32 %v892, %v999
        %v1001 = vpop.f32.mrb[0].mxu0
        %v1002 = vadd.f32 %v894, %v1001
        %1003 = vmatprep.mubr.f32.mxu0 0.0
        %v1004 = vand.u32 %v539, 4294901760
        %v1005 = vsub.f32 %v539, %v1004
        %v1006 = vand.u32 %v1005, 4294901760
        %1007 = vmatmul.mubr.f32.gmra.mrb[0].mxu0 %v1006
        %v1008 = vpop.f32.mrb[0].mxu0
        %v1009 = vadd.f32 %v900, %v1008
        %v1010 = vpop.f32.mrb[0].mxu0
        %v1011 = vadd.f32 %v902, %v1010
        %1012 = vdwg.mxu0
        %v1013 = vand.u32 %v485, 4294901760
        %v1014 = vsub.f32 %v485, %v1013
        %v1015 = vand.u32 %v1014, 4294901760
        %1016 = vmatprep.subr.mxu0 %v1015
        %v1017 = vand.u32 %v484, 4294901760
        %v1018 = vsub.f32 %v484, %v1017
        %v1019 = vand.u32 %v1018, 4294901760
        %1020 = vmatpush1.msra.mxu0 %v1019
        %v1021 = vand.u32 %v489, 4294901760
        %v1022 = vsub.f32 %v489, %v1021
        %v1023 = vand.u32 %v1022, 4294901760
        %1024 = vmatprep.subr.mxu0 %v1023
        %v1025 = vand.u32 %v488, 4294901760
        %v1026 = vsub.f32 %v488, %v1025
        %v1027 = vand.u32 %v1026, 4294901760
        %1028 = vmatpush1.msra.mxu0 %v1027
        %v1029 = vand.u32 %v493, 4294901760
        %v1030 = vsub.f32 %v493, %v1029
        %v1031 = vand.u32 %v1030, 4294901760
        %1032 = vmatprep.subr.mxu0 %v1031
        %v1033 = vand.u32 %v492, 4294901760
        %v1034 = vsub.f32 %v492, %v1033
        %v1035 = vand.u32 %v1034, 4294901760
        %1036 = vmatpush1.msra.mxu0 %v1035
        %v1037 = vand.u32 %v497, 4294901760
        %v1038 = vsub.f32 %v497, %v1037
        %v1039 = vand.u32 %v1038, 4294901760
        %1040 = vmatprep.subr.mxu0 %v1039
        %v1041 = vand.u32 %v496, 4294901760
        %v1042 = vsub.f32 %v496, %v1041
        %v1043 = vand.u32 %v1042, 4294901760
        %1044 = vmatpush1.msra.mxu0 %v1043
        %1045 = vmatprep.subr.mxu0 0.0
        %1046 = vmatpush1.msra.mxu0 0.0
        %1047 = vmatprep.subr.mxu0 0.0
        %1048 = vmatpush1.msra.mxu0 0.0
        %1049 = vmatprep.subr.mxu0 0.0
        %1050 = vmatpush1.msra.mxu0 0.0
        %1051 = vmatprep.subr.mxu0 0.0
        %1052 = vmatpush1.msra.mxu0 0.0
        %1053 = vmatprep.subr.mxu0 0.0
        %1054 = vmatpush1.msra.mxu0 0.0
        %1055 = vmatprep.subr.mxu0 0.0
        %1056 = vmatpush1.msra.mxu0 0.0
        %1057 = vmatprep.subr.mxu0 0.0
        %1058 = vmatpush1.msra.mxu0 0.0
        %1059 = vmatprep.subr.mxu0 0.0
        %1060 = vmatpush1.msra.mxu0 0.0
        %1061 = vmatprep.subr.mxu0 0.0
        %1062 = vmatpush1.msra.mxu0 0.0
        %1063 = vmatprep.subr.mxu0 0.0
        %1064 = vmatpush1.msra.mxu0 0.0
        %1065 = vmatprep.subr.mxu0 0.0
        %1066 = vmatpush1.msra.mxu0 0.0
        %1067 = vmatprep.subr.mxu0 0.0
        %1068 = vmatpush1.msra.mxu0 0.0
        %1069 = vmatprep.subr.mxu0 0.0
        %1070 = vmatpush1.msra.mxu0 0.0
        %1071 = vmatprep.subr.mxu0 0.0
        %1072 = vmatpush1.msra.mxu0 0.0
        %1073 = vmatprep.subr.mxu0 0.0
        %1074 = vmatpush1.msra.mxu0 0.0
        %1075 = vmatprep.subr.mxu0 0.0
        %1076 = vmatpush1.msra.mxu0 0.0
        %1077 = vmatprep.subr.mxu0 0.0
        %1078 = vmatpush1.msra.mxu0 0.0
        %1079 = vmatprep.subr.mxu0 0.0
        %1080 = vmatpush1.msra.mxu0 0.0
        %1081 = vmatprep.subr.mxu0 0.0
        %1082 = vmatpush1.msra.mxu0 0.0
        %1083 = vmatprep.subr.mxu0 0.0
        %1084 = vmatpush1.msra.mxu0 0.0
        %1085 = vmatprep.subr.mxu0 0.0
        %1086 = vmatpush1.msra.mxu0 0.0
        %1087 = vmatprep.subr.mxu0 0.0
        %1088 = vmatpush1.msra.mxu0 0.0
        %1089 = vmatprep.subr.mxu0 0.0
        %1090 = vmatpush1.msra.mxu0 0.0
        %1091 = vmatprep.subr.mxu0 0.0
        %1092 = vmatpush1.msra.mxu0 0.0
        %1093 = vmatprep.subr.mxu0 0.0
        %1094 = vmatpush1.msra.mxu0 0.0
        %1095 = vmatprep.subr.mxu0 0.0
        %1096 = vmatpush1.msra.mxu0 0.0
        %1097 = vmatprep.subr.mxu0 0.0
        %1098 = vmatpush1.msra.mxu0 0.0
        %1099 = vmatprep.subr.mxu0 0.0
        %1100 = vmatpush1.msra.mxu0 0.0
        %1101 = vmatprep.mubr.f32.mxu0 0.0
        %v1102 = vand.u32 %v530, 4294901760
        %1103 = vmatmul.mubr.f32.gmra.mrb[0].mxu0 %v1102
        %v1104 = vpop.f32.mrb[0].mxu0
        %v1105 = vadd.f32 %v982, %v1104
        %v1106 = vpop.f32.mrb[0].mxu0
        %v1107 = vadd.f32 %v984, %v1106
        %1108 = vmatprep.mubr.f32.mxu0 0.0
        %v1109 = vand.u32 %v533, 4294901760
        %1110 = vmatmul.mubr.f32.gmra.mrb[0].mxu0 %v1109
        %v1111 = vpop.f32.mrb[0].mxu0
        %v1112 = vadd.f32 %v991, %v1111
        %v1113 = vpop.f32.mrb[0].mxu0
        %v1114 = vadd.f32 %v993, %v1113
        %1115 = vmatprep.mubr.f32.mxu0 0.0
        %v1116 = vand.u32 %v536, 4294901760
        %1117 = vmatmul.mubr.f32.gmra.mrb[0].mxu0 %v1116
        %v1118 = vpop.f32.mrb[0].mxu0
        %v1119 = vadd.f32 %v1000, %v1118
        %v1120 = vpop.f32.mrb[0].mxu0
        %v1121 = vadd.f32 %v1002, %v1120
        %1122 = vmatprep.mubr.f32.mxu0 0.0
        %v1123 = vand.u32 %v539, 4294901760
        %1124 = vmatmul.mubr.f32.gmra.mrb[0].mxu0 %v1123
        %v1125 = vpop.f32.mrb[0].mxu0
        %v1126 = vadd.f32 %v1009, %v1125
        %v1127 = vpop.f32.mrb[0].mxu0
        %v1128 = vadd.f32 %v1011, %v1127
        %1129 = vdwg.mxu0
        %v1130 = vand.u32 %v485, 4294901760
        %1131 = vmatprep.subr.mxu0 %v1130
        %v1132 = vand.u32 %v484, 4294901760
        %1133 = vmatpush1.msra.mxu0 %v1132
        %v1134 = vand.u32 %v489, 4294901760
        %1135 = vmatprep.subr.mxu0 %v1134
        %v1136 = vand.u32 %v488, 4294901760
        %1137 = vmatpush1.msra.mxu0 %v1136
        %v1138 = vand.u32 %v493, 4294901760
        %1139 = vmatprep.subr.mxu0 %v1138
        %v1140 = vand.u32 %v492, 4294901760
        %1141 = vmatpush1.msra.mxu0 %v1140
        %v1142 = vand.u32 %v497, 4294901760
        %1143 = vmatprep.subr.mxu0 %v1142
        %v1144 = vand.u32 %v496, 4294901760
        %1145 = vmatpush1.msra.mxu0 %v1144
        %1146 = vmatprep.subr.mxu0 0.0
        %1147 = vmatpush1.msra.mxu0 0.0
        %1148 = vmatprep.subr.mxu0 0.0
        %1149 = vmatpush1.msra.mxu0 0.0
        %1150 = vmatprep.subr.mxu0 0.0
        %1151 = vmatpush1.msra.mxu0 0.0
        %1152 = vmatprep.subr.mxu0 0.0
        %1153 = vmatpush1.msra.mxu0 0.0
        %1154 = vmatprep.subr.mxu0 0.0
        %1155 = vmatpush1.msra.mxu0 0.0
        %1156 = vmatprep.subr.mxu0 0.0
        %1157 = vmatpush1.msra.mxu0 0.0
        %1158 = vmatprep.subr.mxu0 0.0
        %1159 = vmatpush1.msra.mxu0 0.0
        %1160 = vmatprep.subr.mxu0 0.0
        %1161 = vmatpush1.msra.mxu0 0.0
        %1162 = vmatprep.subr.mxu0 0.0
        %1163 = vmatpush1.msra.mxu0 0.0
        %1164 = vmatprep.subr.mxu0 0.0
        %1165 = vmatpush1.msra.mxu0 0.0
        %1166 = vmatprep.subr.mxu0 0.0
        %1167 = vmatpush1.msra.mxu0 0.0
        %1168 = vmatprep.subr.mxu0 0.0
        %1169 = vmatpush1.msra.mxu0 0.0
        %1170 = vmatprep.subr.mxu0 0.0
        %1171 = vmatpush1.msra.mxu0 0.0
        %1172 = vmatprep.subr.mxu0 0.0
        %1173 = vmatpush1.msra.mxu0 0.0
        %1174 = vmatprep.subr.mxu0 0.0
        %1175 = vmatpush1.msra.mxu0 0.0
        %1176 = vmatprep.subr.mxu0 0.0
        %1177 = vmatpush1.msra.mxu0 0.0
        %1178 = vmatprep.subr.mxu0 0.0
        %1179 = vmatpush1.msra.mxu0 0.0
        %1180 = vmatprep.subr.mxu0 0.0
        %1181 = vmatpush1.msra.mxu0 0.0
        %1182 = vmatprep.subr.mxu0 0.0
        %1183 = vmatpush1.msra.mxu0 0.0
        %1184 = vmatprep.subr.mxu0 0.0
        %1185 = vmatpush1.msra.mxu0 0.0
        %1186 = vmatprep.subr.mxu0 0.0
        %1187 = vmatpush1.msra.mxu0 0.0
        %1188 = vmatprep.subr.mxu0 0.0
        %1189 = vmatpush1.msra.mxu0 0.0
        %1190 = vmatprep.subr.mxu0 0.0
        %1191 = vmatpush1.msra.mxu0 0.0
        %1192 = vmatprep.subr.mxu0 0.0
        %1193 = vmatpush1.msra.mxu0 0.0
        %1194 = vmatprep.subr.mxu0 0.0
        %1195 = vmatpush1.msra.mxu0 0.0
        %1196 = vmatprep.subr.mxu0 0.0
        %1197 = vmatpush1.msra.mxu0 0.0
        %1198 = vmatprep.subr.mxu0 0.0
        %1199 = vmatpush1.msra.mxu0 0.0
        %1200 = vmatprep.subr.mxu0 0.0
        %1201 = vmatpush1.msra.mxu0 0.0
        %1202 = vmatprep.mubr.f32.mxu0 0.0
        %v1203 = vand.u32 %v530, 4294901760
        %1204 = vmatmul.mubr.f32.gmra.mrb[0].mxu0 %v1203
        %v1205 = vpop.f32.mrb[0].mxu0
        %v1206 = vadd.f32 %v1105, %v1205
        %v1207 = vpop.f32.mrb[0].mxu0
        %v1208 = vadd.f32 %v1107, %v1207
        %1209 = vmatprep.mubr.f32.mxu0 0.0
        %v1210 = vand.u32 %v533, 4294901760
        %1211 = vmatmul.mubr.f32.gmra.mrb[0].mxu0 %v1210
        %v1212 = vpop.f32.mrb[0].mxu0
        %v1213 = vadd.f32 %v1112, %v1212
        %v1214 = vpop.f32.mrb[0].mxu0
        %v1215 = vadd.f32 %v1114, %v1214
        %1216 = vmatprep.mubr.f32.mxu0 0.0
        %v1217 = vand.u32 %v536, 4294901760
        %1218 = vmatmul.mubr.f32.gmra.mrb[0].mxu0 %v1217
        %v1219 = vpop.f32.mrb[0].mxu0
        %v1220 = vadd.f32 %v1119, %v1219
        %v1221 = vpop.f32.mrb[0].mxu0
        %v1222 = vadd.f32 %v1121, %v1221
        %1223 = vmatprep.mubr.f32.mxu0 0.0
        %v1224 = vand.u32 %v539, 4294901760
        %1225 = vmatmul.mubr.f32.gmra.mrb[0].mxu0 %v1224
        %v1226 = vpop.f32.mrb[0].mxu0
        %v1227 = vadd.f32 %v1126, %v1226
        %v1228 = vpop.f32.mrb[0].mxu0
        %v1229 = vadd.f32 %v1128, %v1228
        %1230 = vdwg.mxu0
        %v1231 = vand.u32 %v487, 4294901760
        %1232 = vmatprep.subr.mxu0 %v1231
        %v1233 = vand.u32 %v486, 4294901760
        %1234 = vmatpush1.msra.mxu0 %v1233
        %v1235 = vand.u32 %v491, 4294901760
        %1236 = vmatprep.subr.mxu0 %v1235
        %v1237 = vand.u32 %v490, 4294901760
        %1238 = vmatpush1.msra.mxu0 %v1237
        %v1239 = vand.u32 %v495, 4294901760
        %1240 = vmatprep.subr.mxu0 %v1239
        %v1241 = vand.u32 %v494, 4294901760
        %1242 = vmatpush1.msra.mxu0 %v1241
        %v1243 = vand.u32 %v499, 4294901760
        %1244 = vmatprep.subr.mxu0 %v1243
        %v1245 = vand.u32 %v498, 4294901760
        %1246 = vmatpush1.msra.mxu0 %v1245
        %1247 = vmatprep.subr.mxu0 0.0
        %1248 = vmatpush1.msra.mxu0 0.0
        %1249 = vmatprep.subr.mxu0 0.0
        %1250 = vmatpush1.msra.mxu0 0.0
        %1251 = vmatprep.subr.mxu0 0.0
        %1252 = vmatpush1.msra.mxu0 0.0
        %1253 = vmatprep.subr.mxu0 0.0
        %1254 = vmatpush1.msra.mxu0 0.0
        %1255 = vmatprep.subr.mxu0 0.0
        %1256 = vmatpush1.msra.mxu0 0.0
        %1257 = vmatprep.subr.mxu0 0.0
        %1258 = vmatpush1.msra.mxu0 0.0
        %1259 = vmatprep.subr.mxu0 0.0
        %1260 = vmatpush1.msra.mxu0 0.0
        %1261 = vmatprep.subr.mxu0 0.0
        %1262 = vmatpush1.msra.mxu0 0.0
        %1263 = vmatprep.subr.mxu0 0.0
        %1264 = vmatpush1.msra.mxu0 0.0
        %1265 = vmatprep.subr.mxu0 0.0
        %1266 = vmatpush1.msra.mxu0 0.0
        %1267 = vmatprep.subr.mxu0 0.0
        %1268 = vmatpush1.msra.mxu0 0.0
        %1269 = vmatprep.subr.mxu0 0.0
        %1270 = vmatpush1.msra.mxu0 0.0
        %1271 = vmatprep.subr.mxu0 0.0
        %1272 = vmatpush1.msra.mxu0 0.0
        %1273 = vmatprep.subr.mxu0 0.0
        %1274 = vmatpush1.msra.mxu0 0.0
        %1275 = vmatprep.subr.mxu0 0.0
        %1276 = vmatpush1.msra.mxu0 0.0
        %1277 = vmatprep.subr.mxu0 0.0
        %1278 = vmatpush1.msra.mxu0 0.0
        %1279 = vmatprep.subr.mxu0 0.0
        %1280 = vmatpush1.msra.mxu0 0.0
        %1281 = vmatprep.subr.mxu0 0.0
        %1282 = vmatpush1.msra.mxu0 0.0
        %1283 = vmatprep.subr.mxu0 0.0
        %1284 = vmatpush1.msra.mxu0 0.0
        %1285 = vmatprep.subr.mxu0 0.0
        %1286 = vmatpush1.msra.mxu0 0.0
        %1287 = vmatprep.subr.mxu0 0.0
        %1288 = vmatpush1.msra.mxu0 0.0
        %1289 = vmatprep.subr.mxu0 0.0
        %1290 = vmatpush1.msra.mxu0 0.0
        %1291 = vmatprep.subr.mxu0 0.0
        %1292 = vmatpush1.msra.mxu0 0.0
        %1293 = vmatprep.subr.mxu0 0.0
        %1294 = vmatpush1.msra.mxu0 0.0
        %1295 = vmatprep.subr.mxu0 0.0
        %1296 = vmatpush1.msra.mxu0 0.0
        %1297 = vmatprep.subr.mxu0 0.0
        %1298 = vmatpush1.msra.mxu0 0.0
        %1299 = vmatprep.subr.mxu0 0.0
        %1300 = vmatpush1.msra.mxu0 0.0
        %1301 = vmatprep.subr.mxu0 0.0
        %1302 = vmatpush1.msra.mxu0 0.0
        %1303 = vmatprep.mubr.f32.mxu0 0.0
        %v1304 = vand.u32 %v530, 4294901760
        %v1305 = vsub.f32 %v530, %v1304
        %v1306 = vand.u32 %v1305, 4294901760
        %v1307 = vsub.f32 %v1305, %v1306
        %v1308 = vand.u32 %v1307, 4294901760
        %1309 = vmatmul.mubr.f32.gmra.mrb[0].mxu0 %v1308
        %v1310 = vpop.f32.mrb[0].mxu0
        %v1311 = vadd.f32 %v511, %v1310
        %v1312 = vpop.f32.mrb[0].mxu0
        %v1313 = vadd.f32 %v511, %v1312
        %1314 = vmatprep.mubr.f32.mxu0 0.0
        %v1315 = vand.u32 %v533, 4294901760
        %v1316 = vsub.f32 %v533, %v1315
        %v1317 = vand.u32 %v1316, 4294901760
        %v1318 = vsub.f32 %v1316, %v1317
        %v1319 = vand.u32 %v1318, 4294901760
        %1320 = vmatmul.mubr.f32.gmra.mrb[0].mxu0 %v1319
        %v1321 = vpop.f32.mrb[0].mxu0
        %v1322 = vadd.f32 %v516, %v1321
        %v1323 = vpop.f32.mrb[0].mxu0
        %v1324 = vadd.f32 %v516, %v1323
        %1325 = vmatprep.mubr.f32.mxu0 0.0
        %v1326 = vand.u32 %v536, 4294901760
        %v1327 = vsub.f32 %v536, %v1326
        %v1328 = vand.u32 %v1327, 4294901760
        %v1329 = vsub.f32 %v1327, %v1328
        %v1330 = vand.u32 %v1329, 4294901760
        %1331 = vmatmul.mubr.f32.gmra.mrb[0].mxu0 %v1330
        %v1332 = vpop.f32.mrb[0].mxu0
        %v1333 = vadd.f32 %v521, %v1332
        %v1334 = vpop.f32.mrb[0].mxu0
        %v1335 = vadd.f32 %v521, %v1334
        %1336 = vmatprep.mubr.f32.mxu0 0.0
        %v1337 = vand.u32 %v539, 4294901760
        %v1338 = vsub.f32 %v539, %v1337
        %v1339 = vand.u32 %v1338, 4294901760
        %v1340 = vsub.f32 %v1338, %v1339
        %v1341 = vand.u32 %v1340, 4294901760
        %1342 = vmatmul.mubr.f32.gmra.mrb[0].mxu0 %v1341
        %v1343 = vpop.f32.mrb[0].mxu0
        %v1344 = vadd.f32 %v526, %v1343
        %v1345 = vpop.f32.mrb[0].mxu0
        %v1346 = vadd.f32 %v526, %v1345
        %1347 = vdwg.mxu0
        %v1348 = vand.u32 %v487, 4294901760
        %v1349 = vsub.f32 %v487, %v1348
        %v1350 = vand.u32 %v1349, 4294901760
        %v1351 = vsub.f32 %v1349, %v1350
        %v1352 = vand.u32 %v1351, 4294901760
        %1353 = vmatprep.subr.mxu0 %v1352
        %v1354 = vand.u32 %v486, 4294901760
        %v1355 = vsub.f32 %v486, %v1354
        %v1356 = vand.u32 %v1355, 4294901760
        %v1357 = vsub.f32 %v1355, %v1356
        %v1358 = vand.u32 %v1357, 4294901760
        %1359 = vmatpush1.msra.mxu0 %v1358
        %v1360 = vand.u32 %v491, 4294901760
        %v1361 = vsub.f32 %v491, %v1360
        %v1362 = vand.u32 %v1361, 4294901760
        %v1363 = vsub.f32 %v1361, %v1362
        %v1364 = vand.u32 %v1363, 4294901760
        %1365 = vmatprep.subr.mxu0 %v1364
        %v1366 = vand.u32 %v490, 4294901760
        %v1367 = vsub.f32 %v490, %v1366
        %v1368 = vand.u32 %v1367, 4294901760
        %v1369 = vsub.f32 %v1367, %v1368
        %v1370 = vand.u32 %v1369, 4294901760
        %1371 = vmatpush1.msra.mxu0 %v1370
        %v1372 = vand.u32 %v495, 4294901760
        %v1373 = vsub.f32 %v495, %v1372
        %v1374 = vand.u32 %v1373, 4294901760
        %v1375 = vsub.f32 %v1373, %v1374
        %v1376 = vand.u32 %v1375, 4294901760
        %1377 = vmatprep.subr.mxu0 %v1376
        %v1378 = vand.u32 %v494, 4294901760
        %v1379 = vsub.f32 %v494, %v1378
        %v1380 = vand.u32 %v1379, 4294901760
        %v1381 = vsub.f32 %v1379, %v1380
        %v1382 = vand.u32 %v1381, 4294901760
        %1383 = vmatpush1.msra.mxu0 %v1382
        %v1384 = vand.u32 %v499, 4294901760
        %v1385 = vsub.f32 %v499, %v1384
        %v1386 = vand.u32 %v1385, 4294901760
        %v1387 = vsub.f32 %v1385, %v1386
        %v1388 = vand.u32 %v1387, 4294901760
        %1389 = vmatprep.subr.mxu0 %v1388
        %v1390 = vand.u32 %v498, 4294901760
        %v1391 = vsub.f32 %v498, %v1390
        %v1392 = vand.u32 %v1391, 4294901760
        %v1393 = vsub.f32 %v1391, %v1392
        %v1394 = vand.u32 %v1393, 4294901760
        %1395 = vmatpush1.msra.mxu0 %v1394
        %1396 = vmatprep.subr.mxu0 0.0
        %1397 = vmatpush1.msra.mxu0 0.0
        %1398 = vmatprep.subr.mxu0 0.0
        %1399 = vmatpush1.msra.mxu0 0.0
        %1400 = vmatprep.subr.mxu0 0.0
        %1401 = vmatpush1.msra.mxu0 0.0
        %1402 = vmatprep.subr.mxu0 0.0
        %1403 = vmatpush1.msra.mxu0 0.0
        %1404 = vmatprep.subr.mxu0 0.0
        %1405 = vmatpush1.msra.mxu0 0.0
        %1406 = vmatprep.subr.mxu0 0.0
        %1407 = vmatpush1.msra.mxu0 0.0
        %1408 = vmatprep.subr.mxu0 0.0
        %1409 = vmatpush1.msra.mxu0 0.0
        %1410 = vmatprep.subr.mxu0 0.0
        %1411 = vmatpush1.msra.mxu0 0.0
        %1412 = vmatprep.subr.mxu0 0.0
        %1413 = vmatpush1.msra.mxu0 0.0
        %1414 = vmatprep.subr.mxu0 0.0
        %1415 = vmatpush1.msra.mxu0 0.0
        %1416 = vmatprep.subr.mxu0 0.0
        %1417 = vmatpush1.msra.mxu0 0.0
        %1418 = vmatprep.subr.mxu0 0.0
        %1419 = vmatpush1.msra.mxu0 0.0
        %1420 = vmatprep.subr.mxu0 0.0
        %1421 = vmatpush1.msra.mxu0 0.0
        %1422 = vmatprep.subr.mxu0 0.0
        %1423 = vmatpush1.msra.mxu0 0.0
        %1424 = vmatprep.subr.mxu0 0.0
        %1425 = vmatpush1.msra.mxu0 0.0
        %1426 = vmatprep.subr.mxu0 0.0
        %1427 = vmatpush1.msra.mxu0 0.0
        %1428 = vmatprep.subr.mxu0 0.0
        %1429 = vmatpush1.msra.mxu0 0.0
        %1430 = vmatprep.subr.mxu0 0.0
        %1431 = vmatpush1.msra.mxu0 0.0
        %1432 = vmatprep.subr.mxu0 0.0
        %1433 = vmatpush1.msra.mxu0 0.0
        %1434 = vmatprep.subr.mxu0 0.0
        %1435 = vmatpush1.msra.mxu0 0.0
        %1436 = vmatprep.subr.mxu0 0.0
        %1437 = vmatpush1.msra.mxu0 0.0
        %1438 = vmatprep.subr.mxu0 0.0
        %1439 = vmatpush1.msra.mxu0 0.0
        %1440 = vmatprep.subr.mxu0 0.0
        %1441 = vmatpush1.msra.mxu0 0.0
        %1442 = vmatprep.subr.mxu0 0.0
        %1443 = vmatpush1.msra.mxu0 0.0
        %1444 = vmatprep.subr.mxu0 0.0
        %1445 = vmatpush1.msra.mxu0 0.0
        %1446 = vmatprep.subr.mxu0 0.0
        %1447 = vmatpush1.msra.mxu0 0.0
        %1448 = vmatprep.subr.mxu0 0.0
        %1449 = vmatpush1.msra.mxu0 0.0
        %1450 = vmatprep.subr.mxu0 0.0
        %1451 = vmatpush1.msra.mxu0 0.0
        %1452 = vmatprep.mubr.f32.mxu0 0.0
        %v1453 = vand.u32 %v530, 4294901760
        %1454 = vmatmul.mubr.f32.gmra.mrb[0].mxu0 %v1453
        %v1455 = vpop.f32.mrb[0].mxu0
        %v1456 = vadd.f32 %v1311, %v1455
        %v1457 = vpop.f32.mrb[0].mxu0
        %v1458 = vadd.f32 %v1313, %v1457
        %1459 = vmatprep.mubr.f32.mxu0 0.0
        %v1460 = vand.u32 %v533, 4294901760
        %1461 = vmatmul.mubr.f32.gmra.mrb[0].mxu0 %v1460
        %v1462 = vpop.f32.mrb[0].mxu0
        %v1463 = vadd.f32 %v1322, %v1462
        %v1464 = vpop.f32.mrb[0].mxu0
        %v1465 = vadd.f32 %v1324, %v1464
        %1466 = vmatprep.mubr.f32.mxu0 0.0
        %v1467 = vand.u32 %v536, 4294901760
        %1468 = vmatmul.mubr.f32.gmra.mrb[0].mxu0 %v1467
        %v1469 = vpop.f32.mrb[0].mxu0
        %v1470 = vadd.f32 %v1333, %v1469
        %v1471 = vpop.f32.mrb[0].mxu0
        %v1472 = vadd.f32 %v1335, %v1471
        %1473 = vmatprep.mubr.f32.mxu0 0.0
        %v1474 = vand.u32 %v539, 4294901760
        %1475 = vmatmul.mubr.f32.gmra.mrb[0].mxu0 %v1474
        %v1476 = vpop.f32.mrb[0].mxu0
        %v1477 = vadd.f32 %v1344, %v1476
        %v1478 = vpop.f32.mrb[0].mxu0
        %v1479 = vadd.f32 %v1346, %v1478
        %1480 = vdwg.mxu0
        %v1481 = vand.u32 %v487, 4294901760
        %v1482 = vsub.f32 %v487, %v1481
        %1483 = vmatprep.subr.mxu0 %v1482
        %v1484 = vand.u32 %v486, 4294901760
        %v1485 = vsub.f32 %v486, %v1484
        %1486 = vmatpush1.msra.mxu0 %v1485
        %v1487 = vand.u32 %v491, 4294901760
        %v1488 = vsub.f32 %v491, %v1487
        %1489 = vmatprep.subr.mxu0 %v1488
        %v1490 = vand.u32 %v490, 4294901760
        %v1491 = vsub.f32 %v490, %v1490
        %1492 = vmatpush1.msra.mxu0 %v1491
        %v1493 = vand.u32 %v495, 4294901760
        %v1494 = vsub.f32 %v495, %v1493
        %1495 = vmatprep.subr.mxu0 %v1494
        %v1496 = vand.u32 %v494, 4294901760
        %v1497 = vsub.f32 %v494, %v1496
        %1498 = vmatpush1.msra.mxu0 %v1497
        %v1499 = vand.u32 %v499, 4294901760
        %v1500 = vsub.f32 %v499, %v1499
        %1501 = vmatprep.subr.mxu0 %v1500
        %v1502 = vand.u32 %v498, 4294901760
        %v1503 = vsub.f32 %v498, %v1502
        %1504 = vmatpush1.msra.mxu0 %v1503
        %1505 = vmatprep.subr.mxu0 0.0
        %1506 = vmatpush1.msra.mxu0 0.0
        %1507 = vmatprep.subr.mxu0 0.0
        %1508 = vmatpush1.msra.mxu0 0.0
        %1509 = vmatprep.subr.mxu0 0.0
        %1510 = vmatpush1.msra.mxu0 0.0
        %1511 = vmatprep.subr.mxu0 0.0
        %1512 = vmatpush1.msra.mxu0 0.0
        %1513 = vmatprep.subr.mxu0 0.0
        %1514 = vmatpush1.msra.mxu0 0.0
        %1515 = vmatprep.subr.mxu0 0.0
        %1516 = vmatpush1.msra.mxu0 0.0
        %1517 = vmatprep.subr.mxu0 0.0
        %1518 = vmatpush1.msra.mxu0 0.0
        %1519 = vmatprep.subr.mxu0 0.0
        %1520 = vmatpush1.msra.mxu0 0.0
        %1521 = vmatprep.subr.mxu0 0.0
        %1522 = vmatpush1.msra.mxu0 0.0
        %1523 = vmatprep.subr.mxu0 0.0
        %1524 = vmatpush1.msra.mxu0 0.0
        %1525 = vmatprep.subr.mxu0 0.0
        %1526 = vmatpush1.msra.mxu0 0.0
        %1527 = vmatprep.subr.mxu0 0.0
        %1528 = vmatpush1.msra.mxu0 0.0
        %1529 = vmatprep.subr.mxu0 0.0
        %1530 = vmatpush1.msra.mxu0 0.0
        %1531 = vmatprep.subr.mxu0 0.0
        %1532 = vmatpush1.msra.mxu0 0.0
        %1533 = vmatprep.subr.mxu0 0.0
        %1534 = vmatpush1.msra.mxu0 0.0
        %1535 = vmatprep.subr.mxu0 0.0
        %1536 = vmatpush1.msra.mxu0 0.0
        %1537 = vmatprep.subr.mxu0 0.0
        %1538 = vmatpush1.msra.mxu0 0.0
        %1539 = vmatprep.subr.mxu0 0.0
        %1540 = vmatpush1.msra.mxu0 0.0
        %1541 = vmatprep.subr.mxu0 0.0
        %1542 = vmatpush1.msra.mxu0 0.0
        %1543 = vmatprep.subr.mxu0 0.0
        %1544 = vmatpush1.msra.mxu0 0.0
        %1545 = vmatprep.subr.mxu0 0.0
        %1546 = vmatpush1.msra.mxu0 0.0
        %1547 = vmatprep.subr.mxu0 0.0
        %1548 = vmatpush1.msra.mxu0 0.0
        %1549 = vmatprep.subr.mxu0 0.0
        %1550 = vmatpush1.msra.mxu0 0.0
        %1551 = vmatprep.subr.mxu0 0.0
        %1552 = vmatpush1.msra.mxu0 0.0
        %1553 = vmatprep.subr.mxu0 0.0
        %1554 = vmatpush1.msra.mxu0 0.0
        %1555 = vmatprep.subr.mxu0 0.0
        %1556 = vmatpush1.msra.mxu0 0.0
        %1557 = vmatprep.subr.mxu0 0.0
        %1558 = vmatpush1.msra.mxu0 0.0
        %1559 = vmatprep.subr.mxu0 0.0
        %1560 = vmatpush1.msra.mxu0 0.0
        %1561 = vmatprep.mubr.f32.mxu0 0.0
        %v1562 = vand.u32 %v530, 4294901760
        %v1563 = vsub.f32 %v530, %v1562
        %1564 = vmatmul.mubr.f32.gmra.mrb[0].mxu0 %v1563
        %v1565 = vpop.f32.mrb[0].mxu0
        %v1566 = vadd.f32 %v1456, %v1565
        %v1567 = vpop.f32.mrb[0].mxu0
        %v1568 = vadd.f32 %v1458, %v1567
        %1569 = vmatprep.mubr.f32.mxu0 0.0
        %v1570 = vand.u32 %v533, 4294901760
        %v1571 = vsub.f32 %v533, %v1570
        %1572 = vmatmul.mubr.f32.gmra.mrb[0].mxu0 %v1571
        %v1573 = vpop.f32.mrb[0].mxu0
        %v1574 = vadd.f32 %v1463, %v1573
        %v1575 = vpop.f32.mrb[0].mxu0
        %v1576 = vadd.f32 %v1465, %v1575
        %1577 = vmatprep.mubr.f32.mxu0 0.0
        %v1578 = vand.u32 %v536, 4294901760
        %v1579 = vsub.f32 %v536, %v1578
        %1580 = vmatmul.mubr.f32.gmra.mrb[0].mxu0 %v1579
        %v1581 = vpop.f32.mrb[0].mxu0
        %v1582 = vadd.f32 %v1470, %v1581
        %v1583 = vpop.f32.mrb[0].mxu0
        %v1584 = vadd.f32 %v1472, %v1583
        %1585 = vmatprep.mubr.f32.mxu0 0.0
        %v1586 = vand.u32 %v539, 4294901760
        %v1587 = vsub.f32 %v539, %v1586
        %1588 = vmatmul.mubr.f32.gmra.mrb[0].mxu0 %v1587
        %v1589 = vpop.f32.mrb[0].mxu0
        %v1590 = vadd.f32 %v1477, %v1589
        %v1591 = vpop.f32.mrb[0].mxu0
        %v1592 = vadd.f32 %v1479, %v1591
        %1593 = vdwg.mxu0
        %v1594 = vand.u32 %v487, 4294901760
        %1595 = vmatprep.subr.mxu0 %v1594
        %v1596 = vand.u32 %v486, 4294901760
        %1597 = vmatpush1.msra.mxu0 %v1596
        %v1598 = vand.u32 %v491, 4294901760
        %1599 = vmatprep.subr.mxu0 %v1598
        %v1600 = vand.u32 %v490, 4294901760
        %1601 = vmatpush1.msra.mxu0 %v1600
        %v1602 = vand.u32 %v495, 4294901760
        %1603 = vmatprep.subr.mxu0 %v1602
        %v1604 = vand.u32 %v494, 4294901760
        %1605 = vmatpush1.msra.mxu0 %v1604
        %v1606 = vand.u32 %v499, 4294901760
        %1607 = vmatprep.subr.mxu0 %v1606
        %v1608 = vand.u32 %v498, 4294901760
        %1609 = vmatpush1.msra.mxu0 %v1608
        %1610 = vmatprep.subr.mxu0 0.0
        %1611 = vmatpush1.msra.mxu0 0.0
        %1612 = vmatprep.subr.mxu0 0.0
        %1613 = vmatpush1.msra.mxu0 0.0
        %1614 = vmatprep.subr.mxu0 0.0
        %1615 = vmatpush1.msra.mxu0 0.0
        %1616 = vmatprep.subr.mxu0 0.0
        %1617 = vmatpush1.msra.mxu0 0.0
        %1618 = vmatprep.subr.mxu0 0.0
        %1619 = vmatpush1.msra.mxu0 0.0
        %1620 = vmatprep.subr.mxu0 0.0
        %1621 = vmatpush1.msra.mxu0 0.0
        %1622 = vmatprep.subr.mxu0 0.0
        %1623 = vmatpush1.msra.mxu0 0.0
        %1624 = vmatprep.subr.mxu0 0.0
        %1625 = vmatpush1.msra.mxu0 0.0
        %1626 = vmatprep.subr.mxu0 0.0
        %1627 = vmatpush1.msra.mxu0 0.0
        %1628 = vmatprep.subr.mxu0 0.0
        %1629 = vmatpush1.msra.mxu0 0.0
        %1630 = vmatprep.subr.mxu0 0.0
        %1631 = vmatpush1.msra.mxu0 0.0
        %1632 = vmatprep.subr.mxu0 0.0
        %1633 = vmatpush1.msra.mxu0 0.0
        %1634 = vmatprep.subr.mxu0 0.0
        %1635 = vmatpush1.msra.mxu0 0.0
        %1636 = vmatprep.subr.mxu0 0.0
        %1637 = vmatpush1.msra.mxu0 0.0
        %1638 = vmatprep.subr.mxu0 0.0
        %1639 = vmatpush1.msra.mxu0 0.0
        %1640 = vmatprep.subr.mxu0 0.0
        %1641 = vmatpush1.msra.mxu0 0.0
        %1642 = vmatprep.subr.mxu0 0.0
        %1643 = vmatpush1.msra.mxu0 0.0
        %1644 = vmatprep.subr.mxu0 0.0
        %1645 = vmatpush1.msra.mxu0 0.0
        %1646 = vmatprep.subr.mxu0 0.0
        %1647 = vmatpush1.msra.mxu0 0.0
        %1648 = vmatprep.subr.mxu0 0.0
        %1649 = vmatpush1.msra.mxu0 0.0
        %1650 = vmatprep.subr.mxu0 0.0
        %1651 = vmatpush1.msra.mxu0 0.0
        %1652 = vmatprep.subr.mxu0 0.0
        %1653 = vmatpush1.msra.mxu0 0.0
        %1654 = vmatprep.subr.mxu0 0.0
        %1655 = vmatpush1.msra.mxu0 0.0
        %1656 = vmatprep.subr.mxu0 0.0
        %1657 = vmatpush1.msra.mxu0 0.0
        %1658 = vmatprep.subr.mxu0 0.0
        %1659 = vmatpush1.msra.mxu0 0.0
        %1660 = vmatprep.subr.mxu0 0.0
        %1661 = vmatpush1.msra.mxu0 0.0
        %1662 = vmatprep.subr.mxu0 0.0
        %1663 = vmatpush1.msra.mxu0 0.0
        %1664 = vmatprep.subr.mxu0 0.0
        %1665 = vmatpush1.msra.mxu0 0.0
        %1666 = vmatprep.mubr.f32.mxu0 0.0
        %v1667 = vand.u32 %v530, 4294901760
        %v1668 = vsub.f32 %v530, %v1667
        %v1669 = vand.u32 %v1668, 4294901760
        %1670 = vmatmul.mubr.f32.gmra.mrb[0].mxu0 %v1669
        %v1671 = vpop.f32.mrb[0].mxu0
        %v1672 = vadd.f32 %v1566, %v1671
        %v1673 = vpop.f32.mrb[0].mxu0
        %v1674 = vadd.f32 %v1568, %v1673
        %1675 = vmatprep.mubr.f32.mxu0 0.0
        %v1676 = vand.u32 %v533, 4294901760
        %v1677 = vsub.f32 %v533, %v1676
        %v1678 = vand.u32 %v1677, 4294901760
        %1679 = vmatmul.mubr.f32.gmra.mrb[0].mxu0 %v1678
        %v1680 = vpop.f32.mrb[0].mxu0
        %v1681 = vadd.f32 %v1574, %v1680
        %v1682 = vpop.f32.mrb[0].mxu0
        %v1683 = vadd.f32 %v1576, %v1682
        %1684 = vmatprep.mubr.f32.mxu0 0.0
        %v1685 = vand.u32 %v536, 4294901760
        %v1686 = vsub.f32 %v536, %v1685
        %v1687 = vand.u32 %v1686, 4294901760
        %1688 = vmatmul.mubr.f32.gmra.mrb[0].mxu0 %v1687
        %v1689 = vpop.f32.mrb[0].mxu0
        %v1690 = vadd.f32 %v1582, %v1689
        %v1691 = vpop.f32.mrb[0].mxu0
        %v1692 = vadd.f32 %v1584, %v1691
        %1693 = vmatprep.mubr.f32.mxu0 0.0
        %v1694 = vand.u32 %v539, 4294901760
        %v1695 = vsub.f32 %v539, %v1694
        %v1696 = vand.u32 %v1695, 4294901760
        %1697 = vmatmul.mubr.f32.gmra.mrb[0].mxu0 %v1696
        %v1698 = vpop.f32.mrb[0].mxu0
        %v1699 = vadd.f32 %v1590, %v1698
        %v1700 = vpop.f32.mrb[0].mxu0
        %v1701 = vadd.f32 %v1592, %v1700
        %1702 = vdwg.mxu0
        %v1703 = vand.u32 %v487, 4294901760
        %v1704 = vsub.f32 %v487, %v1703
        %v1705 = vand.u32 %v1704, 4294901760
        %1706 = vmatprep.subr.mxu0 %v1705
        %v1707 = vand.u32 %v486, 4294901760
        %v1708 = vsub.f32 %v486, %v1707
        %v1709 = vand.u32 %v1708, 4294901760
        %1710 = vmatpush1.msra.mxu0 %v1709
        %v1711 = vand.u32 %v491, 4294901760
        %v1712 = vsub.f32 %v491, %v1711
        %v1713 = vand.u32 %v1712, 4294901760
        %1714 = vmatprep.subr.mxu0 %v1713
        %v1715 = vand.u32 %v490, 4294901760
        %v1716 = vsub.f32 %v490, %v1715
        %v1717 = vand.u32 %v1716, 4294901760
        %1718 = vmatpush1.msra.mxu0 %v1717
        %v1719 = vand.u32 %v495, 4294901760
        %v1720 = vsub.f32 %v495, %v1719
        %v1721 = vand.u32 %v1720, 4294901760
        %1722 = vmatprep.subr.mxu0 %v1721
        %v1723 = vand.u32 %v494, 4294901760
        %v1724 = vsub.f32 %v494, %v1723
        %v1725 = vand.u32 %v1724, 4294901760
        %1726 = vmatpush1.msra.mxu0 %v1725
        %v1727 = vand.u32 %v499, 4294901760
        %v1728 = vsub.f32 %v499, %v1727
        %v1729 = vand.u32 %v1728, 4294901760
        %1730 = vmatprep.subr.mxu0 %v1729
        %v1731 = vand.u32 %v498, 4294901760
        %v1732 = vsub.f32 %v498, %v1731
        %v1733 = vand.u32 %v1732, 4294901760
        %1734 = vmatpush1.msra.mxu0 %v1733
        %1735 = vmatprep.subr.mxu0 0.0
        %1736 = vmatpush1.msra.mxu0 0.0
        %1737 = vmatprep.subr.mxu0 0.0
        %1738 = vmatpush1.msra.mxu0 0.0
        %1739 = vmatprep.subr.mxu0 0.0
        %1740 = vmatpush1.msra.mxu0 0.0
        %1741 = vmatprep.subr.mxu0 0.0
        %1742 = vmatpush1.msra.mxu0 0.0
        %1743 = vmatprep.subr.mxu0 0.0
        %1744 = vmatpush1.msra.mxu0 0.0
        %1745 = vmatprep.subr.mxu0 0.0
        %1746 = vmatpush1.msra.mxu0 0.0
        %1747 = vmatprep.subr.mxu0 0.0
        %1748 = vmatpush1.msra.mxu0 0.0
        %1749 = vmatprep.subr.mxu0 0.0
        %1750 = vmatpush1.msra.mxu0 0.0
        %1751 = vmatprep.subr.mxu0 0.0
        %1752 = vmatpush1.msra.mxu0 0.0
        %1753 = vmatprep.subr.mxu0 0.0
        %1754 = vmatpush1.msra.mxu0 0.0
        %1755 = vmatprep.subr.mxu0 0.0
        %1756 = vmatpush1.msra.mxu0 0.0
        %1757 = vmatprep.subr.mxu0 0.0
        %1758 = vmatpush1.msra.mxu0 0.0
        %1759 = vmatprep.subr.mxu0 0.0
        %1760 = vmatpush1.msra.mxu0 0.0
        %1761 = vmatprep.subr.mxu0 0.0
        %1762 = vmatpush1.msra.mxu0 0.0
        %1763 = vmatprep.subr.mxu0 0.0
        %1764 = vmatpush1.msra.mxu0 0.0
        %1765 = vmatprep.subr.mxu0 0.0
        %1766 = vmatpush1.msra.mxu0 0.0
        %1767 = vmatprep.subr.mxu0 0.0
        %1768 = vmatpush1.msra.mxu0 0.0
        %1769 = vmatprep.subr.mxu0 0.0
        %1770 = vmatpush1.msra.mxu0 0.0
        %1771 = vmatprep.subr.mxu0 0.0
        %1772 = vmatpush1.msra.mxu0 0.0
        %1773 = vmatprep.subr.mxu0 0.0
        %1774 = vmatpush1.msra.mxu0 0.0
        %1775 = vmatprep.subr.mxu0 0.0
        %1776 = vmatpush1.msra.mxu0 0.0
        %1777 = vmatprep.subr.mxu0 0.0
        %1778 = vmatpush1.msra.mxu0 0.0
        %1779 = vmatprep.subr.mxu0 0.0
        %1780 = vmatpush1.msra.mxu0 0.0
        %1781 = vmatprep.subr.mxu0 0.0
        %1782 = vmatpush1.msra.mxu0 0.0
        %1783 = vmatprep.subr.mxu0 0.0
        %1784 = vmatpush1.msra.mxu0 0.0
        %1785 = vmatprep.subr.mxu0 0.0
        %1786 = vmatpush1.msra.mxu0 0.0
        %1787 = vmatprep.subr.mxu0 0.0
        %1788 = vmatpush1.msra.mxu0 0.0
        %1789 = vmatprep.subr.mxu0 0.0
        %1790 = vmatpush1.msra.mxu0 0.0
        %1791 = vmatprep.mubr.f32.mxu0 0.0
        %v1792 = vand.u32 %v530, 4294901760
        %1793 = vmatmul.mubr.f32.gmra.mrb[0].mxu0 %v1792
        %v1794 = vpop.f32.mrb[0].mxu0
        %v1795 = vadd.f32 %v1672, %v1794
        %v1796 = vpop.f32.mrb[0].mxu0
        %v1797 = vadd.f32 %v1674, %v1796
        %1798 = vmatprep.mubr.f32.mxu0 0.0
        %v1799 = vand.u32 %v533, 4294901760
        %1800 = vmatmul.mubr.f32.gmra.mrb[0].mxu0 %v1799
        %v1801 = vpop.f32.mrb[0].mxu0
        %v1802 = vadd.f32 %v1681, %v1801
        %v1803 = vpop.f32.mrb[0].mxu0
        %v1804 = vadd.f32 %v1683, %v1803
        %1805 = vmatprep.mubr.f32.mxu0 0.0
        %v1806 = vand.u32 %v536, 4294901760
        %1807 = vmatmul.mubr.f32.gmra.mrb[0].mxu0 %v1806
        %v1808 = vpop.f32.mrb[0].mxu0
        %v1809 = vadd.f32 %v1690, %v1808
        %v1810 = vpop.f32.mrb[0].mxu0
        %v1811 = vadd.f32 %v1692, %v1810
        %1812 = vmatprep.mubr.f32.mxu0 0.0
        %v1813 = vand.u32 %v539, 4294901760
        %1814 = vmatmul.mubr.f32.gmra.mrb[0].mxu0 %v1813
        %v1815 = vpop.f32.mrb[0].mxu0
        %v1816 = vadd.f32 %v1699, %v1815
        %v1817 = vpop.f32.mrb[0].mxu0
        %v1818 = vadd.f32 %v1701, %v1817
        %1819 = vdwg.mxu0
        %v1820 = vand.u32 %v487, 4294901760
        %1821 = vmatprep.subr.mxu0 %v1820
        %v1822 = vand.u32 %v486, 4294901760
        %1823 = vmatpush1.msra.mxu0 %v1822
        %v1824 = vand.u32 %v491, 4294901760
        %1825 = vmatprep.subr.mxu0 %v1824
        %v1826 = vand.u32 %v490, 4294901760
        %1827 = vmatpush1.msra.mxu0 %v1826
        %v1828 = vand.u32 %v495, 4294901760
        %1829 = vmatprep.subr.mxu0 %v1828
        %v1830 = vand.u32 %v494, 4294901760
        %1831 = vmatpush1.msra.mxu0 %v1830
        %v1832 = vand.u32 %v499, 4294901760
        %1833 = vmatprep.subr.mxu0 %v1832
        %v1834 = vand.u32 %v498, 4294901760
        %1835 = vmatpush1.msra.mxu0 %v1834
        %1836 = vmatprep.subr.mxu0 0.0
        %1837 = vmatpush1.msra.mxu0 0.0
        %1838 = vmatprep.subr.mxu0 0.0
        %1839 = vmatpush1.msra.mxu0 0.0
        %1840 = vmatprep.subr.mxu0 0.0
        %1841 = vmatpush1.msra.mxu0 0.0
        %1842 = vmatprep.subr.mxu0 0.0
        %1843 = vmatpush1.msra.mxu0 0.0
        %1844 = vmatprep.subr.mxu0 0.0
        %1845 = vmatpush1.msra.mxu0 0.0
        %1846 = vmatprep.subr.mxu0 0.0
        %1847 = vmatpush1.msra.mxu0 0.0
        %1848 = vmatprep.subr.mxu0 0.0
        %1849 = vmatpush1.msra.mxu0 0.0
        %1850 = vmatprep.subr.mxu0 0.0
        %1851 = vmatpush1.msra.mxu0 0.0
        %1852 = vmatprep.subr.mxu0 0.0
        %1853 = vmatpush1.msra.mxu0 0.0
        %1854 = vmatprep.subr.mxu0 0.0
        %1855 = vmatpush1.msra.mxu0 0.0
        %1856 = vmatprep.subr.mxu0 0.0
        %1857 = vmatpush1.msra.mxu0 0.0
        %1858 = vmatprep.subr.mxu0 0.0
        %1859 = vmatpush1.msra.mxu0 0.0
        %1860 = vmatprep.subr.mxu0 0.0
        %1861 = vmatpush1.msra.mxu0 0.0
        %1862 = vmatprep.subr.mxu0 0.0
        %1863 = vmatpush1.msra.mxu0 0.0
        %1864 = vmatprep.subr.mxu0 0.0
        %1865 = vmatpush1.msra.mxu0 0.0
        %1866 = vmatprep.subr.mxu0 0.0
        %1867 = vmatpush1.msra.mxu0 0.0
        %1868 = vmatprep.subr.mxu0 0.0
        %1869 = vmatpush1.msra.mxu0 0.0
        %1870 = vmatprep.subr.mxu0 0.0
        %1871 = vmatpush1.msra.mxu0 0.0
        %1872 = vmatprep.subr.mxu0 0.0
        %1873 = vmatpush1.msra.mxu0 0.0
        %1874 = vmatprep.subr.mxu0 0.0
        %1875 = vmatpush1.msra.mxu0 0.0
        %1876 = vmatprep.subr.mxu0 0.0
        %1877 = vmatpush1.msra.mxu0 0.0
        %1878 = vmatprep.subr.mxu0 0.0
        %1879 = vmatpush1.msra.mxu0 0.0
        %1880 = vmatprep.subr.mxu0 0.0
        %1881 = vmatpush1.msra.mxu0 0.0
        %1882 = vmatprep.subr.mxu0 0.0
        %1883 = vmatpush1.msra.mxu0 0.0
        %1884 = vmatprep.subr.mxu0 0.0
        %1885 = vmatpush1.msra.mxu0 0.0
        %1886 = vmatprep.subr.mxu0 0.0
        %1887 = vmatpush1.msra.mxu0 0.0
        %1888 = vmatprep.subr.mxu0 0.0
        %1889 = vmatpush1.msra.mxu0 0.0
        %1890 = vmatprep.subr.mxu0 0.0
        %1891 = vmatpush1.msra.mxu0 0.0
        %1892 = vmatprep.mubr.f32.mxu0 0.0
        %v1893 = vand.u32 %v530, 4294901760
        %1894 = vmatmul.mubr.f32.gmra.mrb[0].mxu0 %v1893
        %v1895 = vpop.f32.mrb[0].mxu0
        %v1896 = vadd.f32 %v1795, %v1895
        %v1897 = vpop.f32.mrb[0].mxu0
        %v1898 = vadd.f32 %v1797, %v1897
        %1899 = vmatprep.mubr.f32.mxu0 0.0
        %v1900 = vand.u32 %v533, 4294901760
        %1901 = vmatmul.mubr.f32.gmra.mrb[0].mxu0 %v1900
        %v1902 = vpop.f32.mrb[0].mxu0
        %v1903 = vadd.f32 %v1802, %v1902
        %v1904 = vpop.f32.mrb[0].mxu0
        %v1905 = vadd.f32 %v1804, %v1904
        %1906 = vmatprep.mubr.f32.mxu0 0.0
        %v1907 = vand.u32 %v536, 4294901760
        %1908 = vmatmul.mubr.f32.gmra.mrb[0].mxu0 %v1907
        %v1909 = vpop.f32.mrb[0].mxu0
        %v1910 = vadd.f32 %v1809, %v1909
        %v1911 = vpop.f32.mrb[0].mxu0
        %v1912 = vadd.f32 %v1811, %v1911
        %1913 = vmatprep.mubr.f32.mxu0 0.0
        %v1914 = vand.u32 %v539, 4294901760
        %1915 = vmatmul.mubr.f32.gmra.mrb[0].mxu0 %v1914
        %v1916 = vpop.f32.mrb[0].mxu0
        %v1917 = vadd.f32 %v1816, %v1916
        %v1918 = vpop.f32.mrb[0].mxu0
        %v1919 = vadd.f32 %v1818, %v1918
        %1920 = vdwg.mxu0
        %v1921 = vtanh.pop %v1206
        %v1922 = vtanh.pop %v1208
        %v1923 = vtanh.pop %v1896
        %v1924 = vtanh.pop %v1898
        %v1925 = vtanh.pop %v1213
        %v1926 = vtanh.pop %v1215
        %v1927 = vtanh.pop %v1903
        %v1928 = vtanh.pop %v1905
        %v1929 = vtanh.pop %v1220
        %v1930 = vtanh.pop %v1222
        %v1931 = vtanh.pop %v1910
        %v1932 = vtanh.pop %v1912
        %v1933 = vtanh.pop %v1227
        %v1934 = vtanh.pop %v1229
        %v1935 = vtanh.pop %v1917
        %v1936 = vtanh.pop %v1919
        %v1937 = vld [vmem:[%s5] sm:$0xff]
        %v1938 = vld [vmem:[%s5 + $0x8] sm:$0xff]
        %v1939 = vld [vmem:[%s5 + $0x10] sm:$0xff]
        %v1940 = vld [vmem:[%s5 + $0x18] sm:$0xff]
        %1942 = vset.pattern.permute.xlu0 0
        %1943 = vperm.xlu0 %1942, %v1937
        %v1944 = vpop.permute.xlu0 %1943
        %1947 = vset.pattern.permute.xlu0 0
        %1948 = vperm.xlu0 %1947, %v1938
        %v1949 = vpop.permute.xlu0 %1948
        %1952 = vset.pattern.permute.xlu0 0
        %1953 = vperm.xlu0 %1952, %v1939
        %v1954 = vpop.permute.xlu0 %1953
        %1957 = vset.pattern.permute.xlu0 0
        %1958 = vperm.xlu0 %1957, %v1940
        %v1959 = vpop.permute.xlu0 %1958
        %v1961 = vmul.f32 %v1944, %v1921
        %v1962 = vmul.f32 %v1944, %v1922
        %v1963 = vmul.f32 %v1944, %v1923
        %v1964 = vmul.f32 %v1944, %v1924
        %v1965 = vmul.f32 %v1949, %v1925
        %v1966 = vmul.f32 %v1949, %v1926
        %v1967 = vmul.f32 %v1949, %v1927
        %v1968 = vmul.f32 %v1949, %v1928
        %v1969 = vmul.f32 %v1954, %v1929
        %v1970 = vmul.f32 %v1954, %v1930
        %v1971 = vmul.f32 %v1954, %v1931
        %v1972 = vmul.f32 %v1954, %v1932
        %v1973 = vmul.f32 %v1959, %v1933
        %v1974 = vmul.f32 %v1959, %v1934
        %v1975 = vmul.f32 %v1959, %v1935
        %v1976 = vmul.f32 %v1959, %v1936
        %v1977 = vadd.f32 %v1961, %v1965
        %v1978 = vadd.f32 %v1977, %v1969
        %v1979 = vadd.f32 %v1978, %v1973
        %v1980 = vrot.slane %v1979, 4
        %v1981 = vadd.f32 %v1979, %v1980
        %v1982 = vrot.slane %v1981, 2
        %v1983 = vadd.f32 %v1981, %v1982
        %v1984 = vrot.slane %v1983, 1
        %v1985 = vadd.f32 %v1983, %v1984
        %v1986 = vadd.f32 %v1962, %v1966
        %v1987 = vadd.f32 %v1986, %v1970
        %v1988 = vadd.f32 %v1987, %v1974
        %v1989 = vrot.slane %v1988, 4
        %v1990 = vadd.f32 %v1988, %v1989
        %v1991 = vrot.slane %v1990, 2
        %v1992 = vadd.f32 %v1990, %v1991
        %v1993 = vrot.slane %v1992, 1
        %v1994 = vadd.f32 %v1992, %v1993
        %v1995 = vadd.f32 %v1963, %v1967
        %v1996 = vadd.f32 %v1995, %v1971
        %v1997 = vadd.f32 %v1996, %v1975
        %v1998 = vrot.slane %v1997, 4
        %v1999 = vadd.f32 %v1997, %v1998
        %v2000 = vrot.slane %v1999, 2
        %v2001 = vadd.f32 %v1999, %v2000
        %v2002 = vrot.slane %v2001, 1
        %v2003 = vadd.f32 %v2001, %v2002
        %v2004 = vadd.f32 %v1964, %v1968
        %v2005 = vadd.f32 %v2004, %v1972
        %v2006 = vadd.f32 %v2005, %v1976
        %v2007 = vrot.slane %v2006, 4
        %v2008 = vadd.f32 %v2006, %v2007
        %v2009 = vrot.slane %v2008, 2
        %v2010 = vadd.f32 %v2008, %v2009
        %v2011 = vrot.slane %v2010, 1
        %v2012 = vadd.f32 %v2010, %v2011
        %v2013 = vld [vmem:[#allocation2] sm:$0x1]
        %2015 = vset.pattern.permute.xlu0 0
        %2016 = vperm.xlu0 %2015, %v2013
        %v2017 = vpop.permute.xlu0 %2016
        %v2019 = vlaneseq
        %v2020 = vshrl.u32 %v2019, 7
        %v2021 = vsub.s32 0, %v2020
        %v2022 = vrot.slane %v2017, %v2021
        %v2023 = vadd.f32 %v1985, %v2022
        %v2024 = vadd.f32 %v1994, %v2022
        %v2025 = vadd.f32 %v2003, %v2022
        %v2026 = vadd.f32 %v2012, %v2022
        %v2031 = vcombine.low %v2023, %v2024
        %v2032 = vcombine.low %v2025, %v2026
        %v2034 = vunpack.c.l.s4 1966171168
        %v2035 = vunpack.c.0.s8 %v2034
        %v2036 = vlaneseq
        %v2037 = vshrl.u32 %v2036, 7
        %v2038 = vsub.s32 %v2035, %v2037
        %v2039 = vrot.slane %v2031, %v2038
        %v2041 = vunpack.c.l.s4 1966171168
        %v2042 = vunpack.c.0.s8 %v2041
        %v2043 = vlaneseq
        %v2044 = vshrl.u32 %v2043, 7
        %v2045 = vsub.s32 %v2042, %v2044
        %v2046 = vrot.slane %v2032, %v2045
        %v2047 = vcombine.low %v2039, %v2046
        %v2049 = vunpack.c.l.s4 1966171168
        %v2050 = vunpack.c.0.s8 %v2049
        %v2051 = vlaneseq
        %v2052 = vshrl.u32 %v2051, 7
        %v2053 = vsub.s32 %v2050, %v2052
        %v2054 = vrot.slane %v2047, %v2053
        %v2056 = vlaneseq
        %vm2057 = vcmp.ge.s32.totalorder %v2056, 0
        %vm2058 = vcmp.lt.s32.totalorder %v2056, 512
        %vm2059 = vmand %vm2057, %vm2058
        %2060 = vst.msk [vmem:[%s274] sm:$0xf] %vm2059, %v2054
        %s2061 = sand.u32 %s183, 1
        %s2062 = scalar_lea.sflag [#allocation4], %s2061
        %s2063 = sand.u32 %s183, 1
        %s2064 = smul.addr %s2063, 4
        %s2065 = scalar_lea.vmem [#allocation3], %s2064
        // Predicated region
        $region49: #{poisson_mle_forward_xt.1} parent=47 // pred_check
          %p2066 = pneg %p193
        $region50: #{poisson_mle_forward_xt.1} parent=47 // pred_check_branch
          %2068 = sbr.rel (%p2066) target = $region52
        $region51: #{poisson_mle_forward_xt.1} parent=47 // pred_region
          %s2069 = smul.u32 4, %s23
          %s2071 = ssub.s32 64, 64
          %2072 = vsyncadd %s2062, %s2071
          %s2073 = smul.addr %s2069, 16
          %s2074 = scalar_lea.hbm %s7, %s2073
          %s2076 = sshll.u32 %s2065, 4
          %s2077 = int_to_ptr.vmem [resolvable:$true] %s2076
          %2079 = dma.vmem_to_hbm [thread:$0]  %s2077, 64, %s2074, %s2062
        $region52: #{poisson_mle_forward_xt.1} parent=47 // pred_fallthru
          _
      $region48: #{poisson_mle_forward_xt.1} parent=5 // pred_fallthru
        _
      %p2080 = scmp.le.s32.totalorder 2, %s18
      // Predicated region
      $region53: #{poisson_mle_forward_xt.1} parent=5 // pred_check
        %p2081 = pneg %p2080
      $region54: #{poisson_mle_forward_xt.1} parent=5 // pred_check_branch
        %2083 = sbr.rel (%p2081) target = $region56
      $region55: #{poisson_mle_forward_xt.1} parent=5 // pred_region
        %s2084 = ssub.s32 %s18, 2
        // Predicated region
        $region57: #{poisson_mle_forward_xt.1} parent=55 // pred_check
          %p2085 = pneg %p199
        $region58: #{poisson_mle_forward_xt.1} parent=55 // pred_check_branch
          %2087 = sbr.rel (%p2085) target = $region60
        $region59: #{poisson_mle_forward_xt.1} parent=55 // pred_region
          %s2088 = sand.u32 %s184, 1
          %s2089 = scalar_lea.sflag [#allocation4], %s2088
          %s2090 = sand.u32 %s184, 1
          %s2091 = smul.addr %s2090, 4
          %s2092 = scalar_lea.vmem [#allocation3], %s2091
          %2093 = dma.done %s2089, 64
        $region60: #{poisson_mle_forward_xt.1} parent=55 // pred_fallthru
          _
      $region56: #{poisson_mle_forward_xt.1} parent=5 // pred_fallthru
        _
    $region6: #{poisson_mle_forward_xt.1} parent=1 // loop_footer
      %s22 = sadd.s32 1, %s18
    $region7: #{poisson_mle_forward_xt.1} parent=1 // loop_footer_branch
      %17 = sbr.rel target = $region3
    $region8: #{poisson_mle_forward_xt.1} parent=1 // loop_exit
      _
    %2094 = vsyncpa [#allocation4], 1
    %s2095 = scalar_lea.sflag [#allocation4], 1
    %2096 = vsyncpa %s2095, 1

</llo_original>
